<compile_context>
chip_gen: v7x
topology: tpu7x:2x2x1
jax: 0.10.0
libtpu: 0.0.40
codegen_flags: <defaults>
</compile_context>

<pallas_src>
import functools

import jax
import jax.numpy as jnp
from jax.experimental import pallas as pl
from jax.experimental.pallas import tpu as pltpu

_PAD = 128  # lane width every hidden layer is padded to inside the kernel


def wae_layers(input_size):
    """(fan_in, fan_out, followed_by_LayerNorm) for the 8 Linear layers."""
    return [
        (input_size, 80, True), (80, 64, True), (64, 48, True), (48, 2, False),
        (2, 48, True), (48, 64, True), (64, 80, True), (80, input_size, False),
    ]


def _round_up(n, m):
    return (n + m - 1) // m * m


# --------------------------------------------------------------------------
# Kernel
# --------------------------------------------------------------------------
def wae_kernel(x_ref, w_ref, v_ref, out_ref):
    D = x_ref.shape[-1]          # true input_size (x is NOT lane-padded)

    vi = 0                       # static (Python) cursor into the vector slab

    def next_vec():
        # Consumption order is coupled to pack_wae_params: per layer, bias;
        # then gamma, beta if the layer is followed by LayerNorm.
        nonlocal vi
        row = v_ref[vi:vi + 1, :]            # (1, 128) f32
        vi += 1
        return row

    def linear(h, layer, k=None):
        # bf16 x bf16 -> f32 accumulate on the MXU; bias add in f32.
        b = next_vec()
        w = w_ref[layer]                     # (128, 128) bf16
        if k is not None:
            w = w[:k, :]
        return jnp.dot(h.astype(jnp.bfloat16), w,
                       preferred_element_type=jnp.float32) + b

    def layer_norm_relu(h, n_real):
        # LayerNorm over the first n_real lanes.  Lanes >= n_real are exactly
        # zero, so sums over all 128 lanes equal sums over the real features
        # and var = E[x^2] - mu^2 is PyTorch's biased variance (eps inside
        # rsqrt).  All LN/ReLU math stays f32 (v5e has no bf16 VPU/EUP).
        g = next_vec()
        bt = next_vec()
        inv_n = jnp.float32(1.0 / n_real)
        s1 = jnp.sum(h, axis=-1, keepdims=True)
        s2 = jnp.sum(h * h, axis=-1, keepdims=True)
        mu = s1 * inv_n
        var = s2 * inv_n - mu * mu
        inv = jax.lax.rsqrt(var + jnp.float32(1e-5))
        # Padded lanes have gamma = beta = 0, so they stay exactly zero.
        h = (h - mu) * inv * g + bt
        return jnp.maximum(h, 0.0)

    # ---- encoder --------------------------------------------------------
    x = x_ref[...]                                       # (tb, D) f32
    h = layer_norm_relu(linear(x, 0, k=D), 80)
    h = layer_norm_relu(linear(h, 1), 64)
    h = layer_norm_relu(linear(h, 2), 48)
    z = linear(h, 3)                                     # (tb, 128); lanes >= 2 are 0

    # ---- decoder --------------------------------------------------------
    # K=2 Linear on the MXU too (slot has slack; zero weight rows >= 2 make
    # the padded z lanes harmless).
    h = layer_norm_relu(linear(z, 4), 48)
    h = layer_norm_relu(linear(h, 5), 64)
    h = layer_norm_relu(linear(h, 6), 80)
    h = linear(h, 7)                                     # lanes >= D are 0

    # Trace-time sanity check on the slab consumption order.
    assert vi == v_ref.shape[0], (vi, v_ref.shape[0])

    # Single lane-packed output: recon in lanes [0, D), z in lanes [D, D+2).
    out_ref[:, :D] = h[:, :D].astype(out_ref.dtype)
    out_ref[:, D:] = z[:, :2].astype(out_ref.dtype)


# --------------------------------------------------------------------------
# Parameter init & packing
# --------------------------------------------------------------------------
def init_wae_params(input_size, key):
    """Deterministic stand-in init (the spec's weigths_init is not defined).

    Per Linear: W stored pre-transposed as (in, out), bias (1, out); hidden
    Linears are followed by LayerNorm gamma/beta (1, out).
    """
    # TODO(synk): `weigths_init` is undefined in the PyTorch spec; using a
    # deterministic scaled-normal stand-in here.
    params = []
    for fin, fout, has_ln in wae_layers(input_size):
        key, kw = jax.random.split(key)
        w = jax.random.normal(kw, (fin, fout), jnp.float32) / jnp.sqrt(
            jnp.float32(fin))
        b = jnp.full((1, fout), 0.01, jnp.float32)
        params += [w, b]
        if has_ln:
            params += [jnp.ones((1, fout), jnp.float32),
                       jnp.zeros((1, fout), jnp.float32)]
    return params


def pack_wae_params(params, input_size, pad=_PAD):
    """Pack the 28 parameter tensors into two slabs:
       w_slab: (8, pad, pad) bf16 — zero-padded weight matrices
       v_slab: (20, pad)    f32  — bias / gamma / beta rows, in the exact
               order the kernel consumes them (per layer: bias[, gamma, beta]).
    """
    layers = wae_layers(input_size)
    assert input_size <= pad, "pack_wae_params assumes input_size <= 128"
    w_slab = jnp.zeros((len(layers), pad, pad), jnp.float32)
    vec_rows = []

    def padded_row(v):                       # v: (1, n) -> (1, pad)
        return jnp.pad(v, ((0, 0), (0, pad - v.shape[1])))

    pi = 0
    for l, (fin, fout, has_ln) in enumerate(layers):
        w, b = params[pi], params[pi + 1]
        pi += 2
        w_slab = w_slab.at[l, :fin, :fout].set(w)
        vec_rows.append(padded_row(b))
        if has_ln:
            vec_rows.append(padded_row(params[pi]))       # gamma
            vec_rows.append(padded_row(params[pi + 1]))   # beta
            pi += 2
    v_slab = jnp.concatenate(vec_rows, axis=0)
    return w_slab.astype(jnp.bfloat16), v_slab


# --------------------------------------------------------------------------
# Wrapper
# --------------------------------------------------------------------------
@functools.partial(jax.jit, static_argnames=("tb", "min_steps"))
def wae_forward(x, w_slab, v_slab, tb=1024, min_steps=2):
    """Whole encoder->decoder chain in one pallas_call.

    tb:        requested batch tile (sweep 512-2048 per chip on big batches).
    min_steps: minimum number of grid steps; keeps >= 2 "parallel" steps so
               v7x can use both TensorCores even for small/medium batches.

    VMEM at tb=1024: ~0.3 MiB x tile, ~0.5 MiB weight+vector slabs (+ one
    extra pipeline buffer), ~0.5 MiB double-buffered output tile and a few
    MiB of (tb,128) f32 intermediates — comfortably inside the explicit
    32 MiB scoped limit set below (and v7x's 64 MiB physical VMEM).
    """
    B, D = x.shape
    n_layers, P, _ = w_slab.shape
    n_vecs = v_slab.shape[0]
    assert D <= P, "input_size must be <= 128 for this packing"

    # Batch tile: multiple of 16 (bf16 sublane pairing for the intermediates),
    # capped so the grid has at least `min_steps` steps.
    cap = max(16, pl.cdiv(B, min_steps))
    tbe = _round_up(min(tb, cap), 16)
    Bp = _round_up(B, tbe)
    grid = (Bp // tbe,)

    # No cast / lane-pad pass over x: pad the batch only if needed.
    xp = x if Bp == B else jnp.pad(x, ((0, Bp - B), (0, 0)))

    layers = wae_layers(D)
    flops = 2 * Bp * sum(fi * fo for fi, fo, _ in layers)
    transcendentals = 6 * Bp                              # one rsqrt per LN row
    bytes_accessed = (xp.size * xp.dtype.itemsize
                      + Bp * (D + 2) * 4
                      + w_slab.size * 2 + v_slab.size * 4)

    out = pl.pallas_call(
        wae_kernel,
        out_shape=jax.ShapeDtypeStruct((Bp, D + 2), jnp.float32),
        grid_spec=pltpu.PrefetchScalarGridSpec(
            num_scalar_prefetch=0,
            grid=grid,
            in_specs=[
                pl.BlockSpec((tbe, D), lambda i: (i, 0)),
                # Constant index maps: Pallas skips the re-DMA on revisit, so
                # the slabs are fetched from HBM once.
                pl.BlockSpec((n_layers, P, P), lambda i: (0, 0, 0)),
                pl.BlockSpec((n_vecs, P), lambda i: (0, 0)),
            ],
            out_specs=pl.BlockSpec((tbe, D + 2), lambda i: (i, 0)),
        ),
        compiler_params=pltpu.CompilerParams(
            dimension_semantics=("parallel",),
            vmem_limit_bytes=32 * 1024 * 1024,
        ),
        cost_estimate=pl.CostEstimate(
            flops=flops,
            transcendentals=transcendentals,
            bytes_accessed=bytes_accessed,
        ),
    )(xp, w_slab, v_slab)

    x_recon = out[:B, :D]
    z = out[:B, D:D + 2]
    return x_recon, z


# --------------------------------------------------------------------------
# Pure-JAX reference (mirrors kernel math: bf16 matmul operands with f32
# accumulation for all 8 Linears, f32 LayerNorm with var = E[x^2] - mu^2).
# --------------------------------------------------------------------------
def wae_forward_ref(x, params):
    layers = wae_layers(x.shape[-1])
    pi = 0

    def take():
        nonlocal pi
        v = params[pi]
        pi += 1
        return v

    h = x.astype(jnp.float32)
    z = None
    for l, (fin, fout, has_ln) in enumerate(layers):
        w, b = take(), take()
        h = jnp.dot(h.astype(jnp.bfloat16), w.astype(jnp.bfloat16),
                    preferred_element_type=jnp.float32) + b
        if l == 3:
            z = h
        if has_ln:
            g, bt = take(), take()
            mu = jnp.mean(h, axis=-1, keepdims=True)
            var = jnp.mean(h * h, axis=-1, keepdims=True) - mu * mu
            h = (h - mu) * jax.lax.rsqrt(var + 1e-5) * g + bt
            h = jnp.maximum(h, 0.0)
    return h, z


if __name__ == "__main__":
    input_size = 32
    batch = 90       # deliberately not a multiple of the tile -> padding path

    key = jax.random.PRNGKey(0)
    key, kx = jax.random.split(key)
    x = jax.random.normal(kx, (batch, input_size), jnp.float32)

    params = init_wae_params(input_size, key)
    w_slab, v_slab = pack_wae_params(params, input_size)

    # Default: tile is capped to keep >= 2 grid steps (here grid = 2).
    x_recon, z = wae_forward(x, w_slab, v_slab)
    jax.block_until_ready((x_recon, z))
    # Small tile: exercises a longer grid + the batch-padding path (grid = 3).
    x_recon2, z2 = wae_forward(x, w_slab, v_slab, tb=32)
    jax.block_until_ready((x_recon2, z2))

    x_recon_ref, z_ref = wae_forward_ref(x, params)
    assert x_recon.shape == (batch, input_size) and z.shape == (batch, 2)
    for got_r, got_z in ((x_recon, z), (x_recon2, z2)):
        assert jnp.allclose(got_r, x_recon_ref, atol=2e-3, rtol=2e-3), (
            float(jnp.max(jnp.abs(got_r - x_recon_ref))))
        assert jnp.allclose(got_z, z_ref, atol=2e-3, rtol=2e-3), (
            float(jnp.max(jnp.abs(got_z - z_ref))))

    print("KERNEL_OK")
</pallas_src>

<mosaic_0001>
module attributes {stable_mosaic.version = 11 : i64} {
  func.func @wae_kernel(%arg0: i32, %arg1: memref<48x32xf32, #tpu.memory_space<vmem>>, %arg2: memref<8x128x128xbf16, #tpu.memory_space<vmem>>, %arg3: memref<20x128xf32, #tpu.memory_space<vmem>>, %arg4: memref<48x34xf32, #tpu.memory_space<vmem>>) attributes {dimension_semantics = [#tpu.dimension_semantics<parallel>], iteration_bounds = array<i64: 2>, scalar_prefetch = 0 : i64, scratch_operands = 0 : i64, tpu.core_type = #tpu.core_type<tc>, window_params = [{transform_indices = @transform_0, window_bounds = array<i64: 48, 32>}, {pipeline_mode = #tpu.pipeline_mode<synchronous>, transform_indices = @transform_1, window_bounds = array<i64: 8, 128, 128>}, {pipeline_mode = #tpu.pipeline_mode<synchronous>, transform_indices = @transform_2, window_bounds = array<i64: 20, 128>}, {transform_indices = @transform_3, window_bounds = array<i64: 48, 34>}]} {
    %c0 = arith.constant 0 : index
    %c0_0 = arith.constant 0 : index
    %0 = vector.load %arg1[%c0, %c0_0] : memref<48x32xf32, #tpu.memory_space<vmem>>, vector<48x32xf32>
    %c0_1 = arith.constant 0 : index
    %c0_2 = arith.constant 0 : index
    %1 = vector.load %arg3[%c0_1, %c0_2] : memref<20x128xf32, #tpu.memory_space<vmem>>, vector<1x128xf32>
    %c0_3 = arith.constant 0 : index
    %c0_4 = arith.constant 0 : index
    %c0_5 = arith.constant 0 : index
    %2 = vector.load %arg2[%c0_3, %c0_4, %c0_5] : memref<8x128x128xbf16, #tpu.memory_space<vmem>>, vector<1x128x128xbf16>
    %3 = vector.shape_cast %2 : vector<1x128x128xbf16> to vector<128x128xbf16>
    %4 = vector.extract_strided_slice %3 {offsets = [0, 0], sizes = [32, 128], strides = [1, 1]} : vector<128x128xbf16> to vector<32x128xbf16>
    %5 = arith.truncf %0 : vector<48x32xf32> to vector<48x32xbf16>
    %cst = arith.constant dense<0.000000e+00> : vector<48x128xf32>
    %6 = tpu.matmul %5, %4, %cst {dimension_numbers = #tpu.dot_dimension_numbers<[1], [0], [0], [1], [0, 0, 1, 1], [], []>} : vector<48x32xbf16>, vector<32x128xbf16>, vector<48x128xf32> -> vector<48x128xf32>
    %7 = vector.broadcast %1 : vector<1x128xf32> to vector<48x128xf32>
    %8 = arith.addf %6, %7 : vector<48x128xf32>
    %c1 = arith.constant 1 : index
    %c0_6 = arith.constant 0 : index
    %9 = vector.load %arg3[%c1, %c0_6] : memref<20x128xf32, #tpu.memory_space<vmem>>, vector<1x128xf32>
    %c2 = arith.constant 2 : index
    %c0_7 = arith.constant 0 : index
    %10 = vector.load %arg3[%c2, %c0_7] : memref<20x128xf32, #tpu.memory_space<vmem>>, vector<1x128xf32>
    %cst_8 = arith.constant dense<0.000000e+00> : vector<48xf32>
    %11 = vector.multi_reduction <add>, %8, %cst_8 [1] : vector<48x128xf32> to vector<48xf32>
    %12 = vector.shape_cast %11 : vector<48xf32> to vector<48x1xf32>
    %13 = arith.mulf %8, %8 : vector<48x128xf32>
    %cst_9 = arith.constant dense<0.000000e+00> : vector<48xf32>
    %14 = vector.multi_reduction <add>, %13, %cst_9 [1] : vector<48x128xf32> to vector<48xf32>
    %15 = vector.shape_cast %14 : vector<48xf32> to vector<48x1xf32>
    %cst_10 = arith.constant 1.250000e-02 : f32
    %16 = vector.broadcast %cst_10 : f32 to vector<48x1xf32>
    %17 = arith.mulf %12, %16 : vector<48x1xf32>
    %cst_11 = arith.constant 1.250000e-02 : f32
    %18 = vector.broadcast %cst_11 : f32 to vector<48x1xf32>
    %19 = arith.mulf %15, %18 : vector<48x1xf32>
    %20 = arith.mulf %17, %17 : vector<48x1xf32>
    %21 = arith.subf %19, %20 : vector<48x1xf32>
    %cst_12 = arith.constant 9.99999974E-6 : f32
    %22 = vector.broadcast %cst_12 : f32 to vector<48x1xf32>
    %23 = arith.addf %21, %22 : vector<48x1xf32>
    %24 = math.rsqrt %23 : vector<48x1xf32>
    %25 = vector.broadcast %17 : vector<48x1xf32> to vector<48x128xf32>
    %26 = arith.subf %8, %25 : vector<48x128xf32>
    %27 = vector.broadcast %24 : vector<48x1xf32> to vector<48x128xf32>
    %28 = arith.mulf %26, %27 : vector<48x128xf32>
    %29 = vector.broadcast %9 : vector<1x128xf32> to vector<48x128xf32>
    %30 = arith.mulf %28, %29 : vector<48x128xf32>
    %31 = vector.broadcast %10 : vector<1x128xf32> to vector<48x128xf32>
    %32 = arith.addf %30, %31 : vector<48x128xf32>
    %cst_13 = arith.constant 0.000000e+00 : f32
    %33 = vector.broadcast %cst_13 : f32 to vector<48x128xf32>
    %34 = arith.maximumf %32, %33 : vector<48x128xf32>
    %c3 = arith.constant 3 : index
    %c0_14 = arith.constant 0 : index
    %35 = vector.load %arg3[%c3, %c0_14] : memref<20x128xf32, #tpu.memory_space<vmem>>, vector<1x128xf32>
    %c1_15 = arith.constant 1 : index
    %c0_16 = arith.constant 0 : index
    %c0_17 = arith.constant 0 : index
    %36 = vector.load %arg2[%c1_15, %c0_16, %c0_17] : memref<8x128x128xbf16, #tpu.memory_space<vmem>>, vector<1x128x128xbf16>
    %37 = vector.shape_cast %36 : vector<1x128x128xbf16> to vector<128x128xbf16>
    %38 = arith.truncf %34 : vector<48x128xf32> to vector<48x128xbf16>
    %cst_18 = arith.constant dense<0.000000e+00> : vector<48x128xf32>
    %39 = tpu.matmul %38, %37, %cst_18 {dimension_numbers = #tpu.dot_dimension_numbers<[1], [0], [0], [1], [0, 0, 1, 1], [], []>} : vector<48x128xbf16>, vector<128x128xbf16>, vector<48x128xf32> -> vector<48x128xf32>
    %40 = vector.broadcast %35 : vector<1x128xf32> to vector<48x128xf32>
    %41 = arith.addf %39, %40 : vector<48x128xf32>
    %c4 = arith.constant 4 : index
    %c0_19 = arith.constant 0 : index
    %42 = vector.load %arg3[%c4, %c0_19] : memref<20x128xf32, #tpu.memory_space<vmem>>, vector<1x128xf32>
    %c5 = arith.constant 5 : index
    %c0_20 = arith.constant 0 : index
    %43 = vector.load %arg3[%c5, %c0_20] : memref<20x128xf32, #tpu.memory_space<vmem>>, vector<1x128xf32>
    %cst_21 = arith.constant dense<0.000000e+00> : vector<48xf32>
    %44 = vector.multi_reduction <add>, %41, %cst_21 [1] : vector<48x128xf32> to vector<48xf32>
    %45 = vector.shape_cast %44 : vector<48xf32> to vector<48x1xf32>
    %46 = arith.mulf %41, %41 : vector<48x128xf32>
    %cst_22 = arith.constant dense<0.000000e+00> : vector<48xf32>
    %47 = vector.multi_reduction <add>, %46, %cst_22 [1] : vector<48x128xf32> to vector<48xf32>
    %48 = vector.shape_cast %47 : vector<48xf32> to vector<48x1xf32>
    %cst_23 = arith.constant 1.562500e-02 : f32
    %49 = vector.broadcast %cst_23 : f32 to vector<48x1xf32>
    %50 = arith.mulf %45, %49 : vector<48x1xf32>
    %cst_24 = arith.constant 1.562500e-02 : f32
    %51 = vector.broadcast %cst_24 : f32 to vector<48x1xf32>
    %52 = arith.mulf %48, %51 : vector<48x1xf32>
    %53 = arith.mulf %50, %50 : vector<48x1xf32>
    %54 = arith.subf %52, %53 : vector<48x1xf32>
    %cst_25 = arith.constant 9.99999974E-6 : f32
    %55 = vector.broadcast %cst_25 : f32 to vector<48x1xf32>
    %56 = arith.addf %54, %55 : vector<48x1xf32>
    %57 = math.rsqrt %56 : vector<48x1xf32>
    %58 = vector.broadcast %50 : vector<48x1xf32> to vector<48x128xf32>
    %59 = arith.subf %41, %58 : vector<48x128xf32>
    %60 = vector.broadcast %57 : vector<48x1xf32> to vector<48x128xf32>
    %61 = arith.mulf %59, %60 : vector<48x128xf32>
    %62 = vector.broadcast %42 : vector<1x128xf32> to vector<48x128xf32>
    %63 = arith.mulf %61, %62 : vector<48x128xf32>
    %64 = vector.broadcast %43 : vector<1x128xf32> to vector<48x128xf32>
    %65 = arith.addf %63, %64 : vector<48x128xf32>
    %cst_26 = arith.constant 0.000000e+00 : f32
    %66 = vector.broadcast %cst_26 : f32 to vector<48x128xf32>
    %67 = arith.maximumf %65, %66 : vector<48x128xf32>
    %c6 = arith.constant 6 : index
    %c0_27 = arith.constant 0 : index
    %68 = vector.load %arg3[%c6, %c0_27] : memref<20x128xf32, #tpu.memory_space<vmem>>, vector<1x128xf32>
    %c2_28 = arith.constant 2 : index
    %c0_29 = arith.constant 0 : index
    %c0_30 = arith.constant 0 : index
    %69 = vector.load %arg2[%c2_28, %c0_29, %c0_30] : memref<8x128x128xbf16, #tpu.memory_space<vmem>>, vector<1x128x128xbf16>
    %70 = vector.shape_cast %69 : vector<1x128x128xbf16> to vector<128x128xbf16>
    %71 = arith.truncf %67 : vector<48x128xf32> to vector<48x128xbf16>
    %cst_31 = arith.constant dense<0.000000e+00> : vector<48x128xf32>
    %72 = tpu.matmul %71, %70, %cst_31 {dimension_numbers = #tpu.dot_dimension_numbers<[1], [0], [0], [1], [0, 0, 1, 1], [], []>} : vector<48x128xbf16>, vector<128x128xbf16>, vector<48x128xf32> -> vector<48x128xf32>
    %73 = vector.broadcast %68 : vector<1x128xf32> to vector<48x128xf32>
    %74 = arith.addf %72, %73 : vector<48x128xf32>
    %c7 = arith.constant 7 : index
    %c0_32 = arith.constant 0 : index
    %75 = vector.load %arg3[%c7, %c0_32] : memref<20x128xf32, #tpu.memory_space<vmem>>, vector<1x128xf32>
    %c8 = arith.constant 8 : index
    %c0_33 = arith.constant 0 : index
    %76 = vector.load %arg3[%c8, %c0_33] : memref<20x128xf32, #tpu.memory_space<vmem>>, vector<1x128xf32>
    %cst_34 = arith.constant dense<0.000000e+00> : vector<48xf32>
    %77 = vector.multi_reduction <add>, %74, %cst_34 [1] : vector<48x128xf32> to vector<48xf32>
    %78 = vector.shape_cast %77 : vector<48xf32> to vector<48x1xf32>
    %79 = arith.mulf %74, %74 : vector<48x128xf32>
    %cst_35 = arith.constant dense<0.000000e+00> : vector<48xf32>
    %80 = vector.multi_reduction <add>, %79, %cst_35 [1] : vector<48x128xf32> to vector<48xf32>
    %81 = vector.shape_cast %80 : vector<48xf32> to vector<48x1xf32>
    %cst_36 = arith.constant 0.020833334 : f32
    %82 = vector.broadcast %cst_36 : f32 to vector<48x1xf32>
    %83 = arith.mulf %78, %82 : vector<48x1xf32>
    %cst_37 = arith.constant 0.020833334 : f32
    %84 = vector.broadcast %cst_37 : f32 to vector<48x1xf32>
    %85 = arith.mulf %81, %84 : vector<48x1xf32>
    %86 = arith.mulf %83, %83 : vector<48x1xf32>
    %87 = arith.subf %85, %86 : vector<48x1xf32>
    %cst_38 = arith.constant 9.99999974E-6 : f32
    %88 = vector.broadcast %cst_38 : f32 to vector<48x1xf32>
    %89 = arith.addf %87, %88 : vector<48x1xf32>
    %90 = math.rsqrt %89 : vector<48x1xf32>
    %91 = vector.broadcast %83 : vector<48x1xf32> to vector<48x128xf32>
    %92 = arith.subf %74, %91 : vector<48x128xf32>
    %93 = vector.broadcast %90 : vector<48x1xf32> to vector<48x128xf32>
    %94 = arith.mulf %92, %93 : vector<48x128xf32>
    %95 = vector.broadcast %75 : vector<1x128xf32> to vector<48x128xf32>
    %96 = arith.mulf %94, %95 : vector<48x128xf32>
    %97 = vector.broadcast %76 : vector<1x128xf32> to vector<48x128xf32>
    %98 = arith.addf %96, %97 : vector<48x128xf32>
    %cst_39 = arith.constant 0.000000e+00 : f32
    %99 = vector.broadcast %cst_39 : f32 to vector<48x128xf32>
    %100 = arith.maximumf %98, %99 : vector<48x128xf32>
    %c9 = arith.constant 9 : index
    %c0_40 = arith.constant 0 : index
    %101 = vector.load %arg3[%c9, %c0_40] : memref<20x128xf32, #tpu.memory_space<vmem>>, vector<1x128xf32>
    %c3_41 = arith.constant 3 : index
    %c0_42 = arith.constant 0 : index
    %c0_43 = arith.constant 0 : index
    %102 = vector.load %arg2[%c3_41, %c0_42, %c0_43] : memref<8x128x128xbf16, #tpu.memory_space<vmem>>, vector<1x128x128xbf16>
    %103 = vector.shape_cast %102 : vector<1x128x128xbf16> to vector<128x128xbf16>
    %104 = arith.truncf %100 : vector<48x128xf32> to vector<48x128xbf16>
    %cst_44 = arith.constant dense<0.000000e+00> : vector<48x128xf32>
    %105 = tpu.matmul %104, %103, %cst_44 {dimension_numbers = #tpu.dot_dimension_numbers<[1], [0], [0], [1], [0, 0, 1, 1], [], []>} : vector<48x128xbf16>, vector<128x128xbf16>, vector<48x128xf32> -> vector<48x128xf32>
    %106 = vector.broadcast %101 : vector<1x128xf32> to vector<48x128xf32>
    %107 = arith.addf %105, %106 : vector<48x128xf32>
    %c10 = arith.constant 10 : index
    %c0_45 = arith.constant 0 : index
    %108 = vector.load %arg3[%c10, %c0_45] : memref<20x128xf32, #tpu.memory_space<vmem>>, vector<1x128xf32>
    %c4_46 = arith.constant 4 : index
    %c0_47 = arith.constant 0 : index
    %c0_48 = arith.constant 0 : index
    %109 = vector.load %arg2[%c4_46, %c0_47, %c0_48] : memref<8x128x128xbf16, #tpu.memory_space<vmem>>, vector<1x128x128xbf16>
    %110 = vector.shape_cast %109 : vector<1x128x128xbf16> to vector<128x128xbf16>
    %111 = arith.truncf %107 : vector<48x128xf32> to vector<48x128xbf16>
    %cst_49 = arith.constant dense<0.000000e+00> : vector<48x128xf32>
    %112 = tpu.matmul %111, %110, %cst_49 {dimension_numbers = #tpu.dot_dimension_numbers<[1], [0], [0], [1], [0, 0, 1, 1], [], []>} : vector<48x128xbf16>, vector<128x128xbf16>, vector<48x128xf32> -> vector<48x128xf32>
    %113 = vector.broadcast %108 : vector<1x128xf32> to vector<48x128xf32>
    %114 = arith.addf %112, %113 : vector<48x128xf32>
    %c11 = arith.constant 11 : index
    %c0_50 = arith.constant 0 : index
    %115 = vector.load %arg3[%c11, %c0_50] : memref<20x128xf32, #tpu.memory_space<vmem>>, vector<1x128xf32>
    %c12 = arith.constant 12 : index
    %c0_51 = arith.constant 0 : index
    %116 = vector.load %arg3[%c12, %c0_51] : memref<20x128xf32, #tpu.memory_space<vmem>>, vector<1x128xf32>
    %cst_52 = arith.constant dense<0.000000e+00> : vector<48xf32>
    %117 = vector.multi_reduction <add>, %114, %cst_52 [1] : vector<48x128xf32> to vector<48xf32>
    %118 = vector.shape_cast %117 : vector<48xf32> to vector<48x1xf32>
    %119 = arith.mulf %114, %114 : vector<48x128xf32>
    %cst_53 = arith.constant dense<0.000000e+00> : vector<48xf32>
    %120 = vector.multi_reduction <add>, %119, %cst_53 [1] : vector<48x128xf32> to vector<48xf32>
    %121 = vector.shape_cast %120 : vector<48xf32> to vector<48x1xf32>
    %cst_54 = arith.constant 0.020833334 : f32
    %122 = vector.broadcast %cst_54 : f32 to vector<48x1xf32>
    %123 = arith.mulf %118, %122 : vector<48x1xf32>
    %cst_55 = arith.constant 0.020833334 : f32
    %124 = vector.broadcast %cst_55 : f32 to vector<48x1xf32>
    %125 = arith.mulf %121, %124 : vector<48x1xf32>
    %126 = arith.mulf %123, %123 : vector<48x1xf32>
    %127 = arith.subf %125, %126 : vector<48x1xf32>
    %cst_56 = arith.constant 9.99999974E-6 : f32
    %128 = vector.broadcast %cst_56 : f32 to vector<48x1xf32>
    %129 = arith.addf %127, %128 : vector<48x1xf32>
    %130 = math.rsqrt %129 : vector<48x1xf32>
    %131 = vector.broadcast %123 : vector<48x1xf32> to vector<48x128xf32>
    %132 = arith.subf %114, %131 : vector<48x128xf32>
    %133 = vector.broadcast %130 : vector<48x1xf32> to vector<48x128xf32>
    %134 = arith.mulf %132, %133 : vector<48x128xf32>
    %135 = vector.broadcast %115 : vector<1x128xf32> to vector<48x128xf32>
    %136 = arith.mulf %134, %135 : vector<48x128xf32>
    %137 = vector.broadcast %116 : vector<1x128xf32> to vector<48x128xf32>
    %138 = arith.addf %136, %137 : vector<48x128xf32>
    %cst_57 = arith.constant 0.000000e+00 : f32
    %139 = vector.broadcast %cst_57 : f32 to vector<48x128xf32>
    %140 = arith.maximumf %138, %139 : vector<48x128xf32>
    %c13 = arith.constant 13 : index
    %c0_58 = arith.constant 0 : index
    %141 = vector.load %arg3[%c13, %c0_58] : memref<20x128xf32, #tpu.memory_space<vmem>>, vector<1x128xf32>
    %c5_59 = arith.constant 5 : index
    %c0_60 = arith.constant 0 : index
    %c0_61 = arith.constant 0 : index
    %142 = vector.load %arg2[%c5_59, %c0_60, %c0_61] : memref<8x128x128xbf16, #tpu.memory_space<vmem>>, vector<1x128x128xbf16>
    %143 = vector.shape_cast %142 : vector<1x128x128xbf16> to vector<128x128xbf16>
    %144 = arith.truncf %140 : vector<48x128xf32> to vector<48x128xbf16>
    %cst_62 = arith.constant dense<0.000000e+00> : vector<48x128xf32>
    %145 = tpu.matmul %144, %143, %cst_62 {dimension_numbers = #tpu.dot_dimension_numbers<[1], [0], [0], [1], [0, 0, 1, 1], [], []>} : vector<48x128xbf16>, vector<128x128xbf16>, vector<48x128xf32> -> vector<48x128xf32>
    %146 = vector.broadcast %141 : vector<1x128xf32> to vector<48x128xf32>
    %147 = arith.addf %145, %146 : vector<48x128xf32>
    %c14 = arith.constant 14 : index
    %c0_63 = arith.constant 0 : index
    %148 = vector.load %arg3[%c14, %c0_63] : memref<20x128xf32, #tpu.memory_space<vmem>>, vector<1x128xf32>
    %c15 = arith.constant 15 : index
    %c0_64 = arith.constant 0 : index
    %149 = vector.load %arg3[%c15, %c0_64] : memref<20x128xf32, #tpu.memory_space<vmem>>, vector<1x128xf32>
    %cst_65 = arith.constant dense<0.000000e+00> : vector<48xf32>
    %150 = vector.multi_reduction <add>, %147, %cst_65 [1] : vector<48x128xf32> to vector<48xf32>
    %151 = vector.shape_cast %150 : vector<48xf32> to vector<48x1xf32>
    %152 = arith.mulf %147, %147 : vector<48x128xf32>
    %cst_66 = arith.constant dense<0.000000e+00> : vector<48xf32>
    %153 = vector.multi_reduction <add>, %152, %cst_66 [1] : vector<48x128xf32> to vector<48xf32>
    %154 = vector.shape_cast %153 : vector<48xf32> to vector<48x1xf32>
    %cst_67 = arith.constant 1.562500e-02 : f32
    %155 = vector.broadcast %cst_67 : f32 to vector<48x1xf32>
    %156 = arith.mulf %151, %155 : vector<48x1xf32>
    %cst_68 = arith.constant 1.562500e-02 : f32
    %157 = vector.broadcast %cst_68 : f32 to vector<48x1xf32>
    %158 = arith.mulf %154, %157 : vector<48x1xf32>
    %159 = arith.mulf %156, %156 : vector<48x1xf32>
    %160 = arith.subf %158, %159 : vector<48x1xf32>
    %cst_69 = arith.constant 9.99999974E-6 : f32
    %161 = vector.broadcast %cst_69 : f32 to vector<48x1xf32>
    %162 = arith.addf %160, %161 : vector<48x1xf32>
    %163 = math.rsqrt %162 : vector<48x1xf32>
    %164 = vector.broadcast %156 : vector<48x1xf32> to vector<48x128xf32>
    %165 = arith.subf %147, %164 : vector<48x128xf32>
    %166 = vector.broadcast %163 : vector<48x1xf32> to vector<48x128xf32>
    %167 = arith.mulf %165, %166 : vector<48x128xf32>
    %168 = vector.broadcast %148 : vector<1x128xf32> to vector<48x128xf32>
    %169 = arith.mulf %167, %168 : vector<48x128xf32>
    %170 = vector.broadcast %149 : vector<1x128xf32> to vector<48x128xf32>
    %171 = arith.addf %169, %170 : vector<48x128xf32>
    %cst_70 = arith.constant 0.000000e+00 : f32
    %172 = vector.broadcast %cst_70 : f32 to vector<48x128xf32>
    %173 = arith.maximumf %171, %172 : vector<48x128xf32>
    %c16 = arith.constant 16 : index
    %c0_71 = arith.constant 0 : index
    %174 = vector.load %arg3[%c16, %c0_71] : memref<20x128xf32, #tpu.memory_space<vmem>>, vector<1x128xf32>
    %c6_72 = arith.constant 6 : index
    %c0_73 = arith.constant 0 : index
    %c0_74 = arith.constant 0 : index
    %175 = vector.load %arg2[%c6_72, %c0_73, %c0_74] : memref<8x128x128xbf16, #tpu.memory_space<vmem>>, vector<1x128x128xbf16>
    %176 = vector.shape_cast %175 : vector<1x128x128xbf16> to vector<128x128xbf16>
    %177 = arith.truncf %173 : vector<48x128xf32> to vector<48x128xbf16>
    %cst_75 = arith.constant dense<0.000000e+00> : vector<48x128xf32>
    %178 = tpu.matmul %177, %176, %cst_75 {dimension_numbers = #tpu.dot_dimension_numbers<[1], [0], [0], [1], [0, 0, 1, 1], [], []>} : vector<48x128xbf16>, vector<128x128xbf16>, vector<48x128xf32> -> vector<48x128xf32>
    %179 = vector.broadcast %174 : vector<1x128xf32> to vector<48x128xf32>
    %180 = arith.addf %178, %179 : vector<48x128xf32>
    %c17 = arith.constant 17 : index
    %c0_76 = arith.constant 0 : index
    %181 = vector.load %arg3[%c17, %c0_76] : memref<20x128xf32, #tpu.memory_space<vmem>>, vector<1x128xf32>
    %c18 = arith.constant 18 : index
    %c0_77 = arith.constant 0 : index
    %182 = vector.load %arg3[%c18, %c0_77] : memref<20x128xf32, #tpu.memory_space<vmem>>, vector<1x128xf32>
    %cst_78 = arith.constant dense<0.000000e+00> : vector<48xf32>
    %183 = vector.multi_reduction <add>, %180, %cst_78 [1] : vector<48x128xf32> to vector<48xf32>
    %184 = vector.shape_cast %183 : vector<48xf32> to vector<48x1xf32>
    %185 = arith.mulf %180, %180 : vector<48x128xf32>
    %cst_79 = arith.constant dense<0.000000e+00> : vector<48xf32>
    %186 = vector.multi_reduction <add>, %185, %cst_79 [1] : vector<48x128xf32> to vector<48xf32>
    %187 = vector.shape_cast %186 : vector<48xf32> to vector<48x1xf32>
    %cst_80 = arith.constant 1.250000e-02 : f32
    %188 = vector.broadcast %cst_80 : f32 to vector<48x1xf32>
    %189 = arith.mulf %184, %188 : vector<48x1xf32>
    %cst_81 = arith.constant 1.250000e-02 : f32
    %190 = vector.broadcast %cst_81 : f32 to vector<48x1xf32>
    %191 = arith.mulf %187, %190 : vector<48x1xf32>
    %192 = arith.mulf %189, %189 : vector<48x1xf32>
    %193 = arith.subf %191, %192 : vector<48x1xf32>
    %cst_82 = arith.constant 9.99999974E-6 : f32
    %194 = vector.broadcast %cst_82 : f32 to vector<48x1xf32>
    %195 = arith.addf %193, %194 : vector<48x1xf32>
    %196 = math.rsqrt %195 : vector<48x1xf32>
    %197 = vector.broadcast %189 : vector<48x1xf32> to vector<48x128xf32>
    %198 = arith.subf %180, %197 : vector<48x128xf32>
    %199 = vector.broadcast %196 : vector<48x1xf32> to vector<48x128xf32>
    %200 = arith.mulf %198, %199 : vector<48x128xf32>
    %201 = vector.broadcast %181 : vector<1x128xf32> to vector<48x128xf32>
    %202 = arith.mulf %200, %201 : vector<48x128xf32>
    %203 = vector.broadcast %182 : vector<1x128xf32> to vector<48x128xf32>
    %204 = arith.addf %202, %203 : vector<48x128xf32>
    %cst_83 = arith.constant 0.000000e+00 : f32
    %205 = vector.broadcast %cst_83 : f32 to vector<48x128xf32>
    %206 = arith.maximumf %204, %205 : vector<48x128xf32>
    %c19 = arith.constant 19 : index
    %c0_84 = arith.constant 0 : index
    %207 = vector.load %arg3[%c19, %c0_84] : memref<20x128xf32, #tpu.memory_space<vmem>>, vector<1x128xf32>
    %c7_85 = arith.constant 7 : index
    %c0_86 = arith.constant 0 : index
    %c0_87 = arith.constant 0 : index
    %208 = vector.load %arg2[%c7_85, %c0_86, %c0_87] : memref<8x128x128xbf16, #tpu.memory_space<vmem>>, vector<1x128x128xbf16>
    %209 = vector.shape_cast %208 : vector<1x128x128xbf16> to vector<128x128xbf16>
    %210 = arith.truncf %206 : vector<48x128xf32> to vector<48x128xbf16>
    %cst_88 = arith.constant dense<0.000000e+00> : vector<48x128xf32>
    %211 = tpu.matmul %210, %209, %cst_88 {dimension_numbers = #tpu.dot_dimension_numbers<[1], [0], [0], [1], [0, 0, 1, 1], [], []>} : vector<48x128xbf16>, vector<128x128xbf16>, vector<48x128xf32> -> vector<48x128xf32>
    %212 = vector.broadcast %207 : vector<1x128xf32> to vector<48x128xf32>
    %213 = arith.addf %211, %212 : vector<48x128xf32>
    %214 = vector.extract_strided_slice %213 {offsets = [0, 0], sizes = [48, 32], strides = [1, 1]} : vector<48x128xf32> to vector<48x32xf32>
    %c0_89 = arith.constant 0 : index
    %c0_90 = arith.constant 0 : index
    %215 = vector.load %arg4[%c0_89, %c0_90] : memref<48x34xf32, #tpu.memory_space<vmem>>, vector<48x32xf32>
    tpu.vector_store %arg4[%c0_89, %c0_90], %214 {strides = array<i32>} : memref<48x34xf32, #tpu.memory_space<vmem>>, vector<48x32xf32>,
    %216 = vector.extract_strided_slice %107 {offsets = [0, 0], sizes = [48, 2], strides = [1, 1]} : vector<48x128xf32> to vector<48x2xf32>
    %c0_91 = arith.constant 0 : index
    %c32 = arith.constant 32 : index
    %217 = vector.load %arg4[%c0_91, %c32] : memref<48x34xf32, #tpu.memory_space<vmem>>, vector<48x2xf32>
    tpu.vector_store %arg4[%c0_91, %c32], %216 {strides = array<i32>} : memref<48x34xf32, #tpu.memory_space<vmem>>, vector<48x2xf32>,
    return
  }
  func.func @transform_0(%arg0: i32) -> (i32, i32) {
    %c0_i32 = arith.constant 0 : i32
    %c0_i32_0 = arith.constant 0 : i32
    return %arg0, %c0_i32 : i32, i32
  }
  func.func @transform_1(%arg0: i32) -> (i32, i32, i32) {
    %c0_i32 = arith.constant 0 : i32
    %c0_i32_0 = arith.constant 0 : i32
    %c0_i32_1 = arith.constant 0 : i32
    %c0_i32_2 = arith.constant 0 : i32
    return %c0_i32, %c0_i32_0, %c0_i32_1 : i32, i32, i32
  }
  func.func @transform_2(%arg0: i32) -> (i32, i32) {
    %c0_i32 = arith.constant 0 : i32
    %c0_i32_0 = arith.constant 0 : i32
    %c0_i32_1 = arith.constant 0 : i32
    return %c0_i32, %c0_i32_0 : i32, i32
  }
  func.func @transform_3(%arg0: i32) -> (i32, i32) {
    %c0_i32 = arith.constant 0 : i32
    %c0_i32_0 = arith.constant 0 : i32
    return %arg0, %c0_i32 : i32, i32
  }
}

</mosaic_0001>

<llo_original>
// kernel: wae_forward.1
$region0: #{wae_forward.1}
  #allocation0 [shape = 'u32[]', space=smem, size = 0x4, offset = 0x4, fixed_abs, tag = 'smem constant byte address 0x4 - core index']
  #allocation1 [shape = 'u32[144,128]{1,0:T(1,128)}', space=vmem, size = 0x12000, scoped, tag = 'internal scratch']
  %s0 = inlined_call_operand.vmem [shape: f32[96,32], index: 0, kind: input, shape index: {}]
  %s1 = inlined_call_operand.hbm [shape: bf16[8,128,128], index: 1, kind: input, shape index: {}]
  %s2 = inlined_call_operand.vmem [shape: f32[20,128], index: 2, kind: input, shape index: {}]
  %s3 = inlined_call_operand.vmem [shape: f32[96,34], index: 3, kind: output, shape index: {}]
  %s4 = sld [smem:[#allocation0]]
  $region49: #{wae_forward.1} parent=0
    _
  %s6 = ssub.s32 1, %s4
  %s7 = scalar_select 0, %s6, %s4
  $region1: #{wae_forward.1} parent=0
    #allocation2 [shape = 'u8[262144]{0}', space=vmem, size = 0x40000, scoped, tag = 'input window, operand 1, single buffered']
    #allocation3 [shape = 's32[2]{0}', space=sflag, size = 0x8, scoped, tag = 'scoped memory for wae_forward.1']
    %8 = vsyncpa [#allocation3], 0
    loop: start=0, step=1, limit=4
    $region2: #{wae_forward.1} parent=1 // loop_pre_header
      _
    $region3: #{wae_forward.1} parent=1 // loop_header
      %s10 = sphi 0, %s14
      %p11 = scmp.ge.s32.totalorder %s10, 4
      %s20 = sphi 0, %s22
      %s23 = sphi 0, %s20
      %s24 = sphi 0, %s23
      %s40 = sphi 0, %s24
      %s44 = sphi 0, %s44
      %s46 = sphi 0, %s44
      %s47 = sphi 0, %s46
      %s61 = sphi 0, %s47
      %s65 = sphi 0, %s65
      %s67 = sphi 0, %s65
      %s68 = sphi 0, %s67
      %s82 = sphi 0, %s68
      %s88 = sphi 0, %s90
      %s91 = sphi 0, %s88
      %s92 = sphi 0, %s91
      %s108 = sphi 0, %s92
    $region4: #{wae_forward.1} parent=1 // loop_header_branch
      %13 = sbr.rel (%p11) target = $region8
    $region5: #{wae_forward.1} parent=1 // loop_body
      %s15 = ssub.s32 %s10, 1
      %s16 = ssub.s32 %s10, 2
      %s17 = sadd.s32 %s10, 1
      %s18 = ssub.s32 %s10, %s17
      %p19 = scmp.eq.s32.totalorder %s18, 0
      %s21 = sadd.s32 %s20, 1
      %s22 = scalar_select %p19, %s20, %s21
      %p25 = pneg %p19
      %p26 = scmp.eq.s32.totalorder %s10, 1
      %p27 = por %p25, %p26
      %p28 = scmp.ne.s32.totalorder %s20, %s23
      %p29 = scmp.eq.s32.totalorder %s10, 0
      %p30 = por %p28, %p29
      %p31 = scmp.ne.s32.totalorder %s20, %s23
      %p32 = scmp.eq.s32.totalorder %s15, 1
      %p33 = por %p31, %p32
      %p34 = scmp.ne.s32.totalorder %s23, %s24
      %p35 = scmp.eq.s32.totalorder %s15, 0
      %p36 = por %p34, %p35
      %p37 = scmp.ne.s32.totalorder %s23, %s24
      %p38 = scmp.eq.s32.totalorder %s16, 1
      %p39 = por %p37, %p38
      %p41 = scmp.ne.s32.totalorder %s24, %s40
      %p42 = scmp.eq.s32.totalorder %s16, 0
      %p43 = por %p41, %p42
      %s45 = sadd.s32 %s44, 1
      %p48 = scmp.eq.s32.totalorder %s10, 1
      %p49 = scmp.ne.s32.totalorder %s44, %s46
      %p50 = scmp.eq.s32.totalorder %s10, 0
      %p51 = por %p49, %p50
      %p52 = scmp.ne.s32.totalorder %s44, %s46
      %p53 = scmp.eq.s32.totalorder %s15, 1
      %p54 = por %p52, %p53
      %p55 = scmp.ne.s32.totalorder %s46, %s47
      %p56 = scmp.eq.s32.totalorder %s15, 0
      %p57 = por %p55, %p56
      %p58 = scmp.ne.s32.totalorder %s46, %s47
      %p59 = scmp.eq.s32.totalorder %s16, 1
      %p60 = por %p58, %p59
      %p62 = scmp.ne.s32.totalorder %s47, %s61
      %p63 = scmp.eq.s32.totalorder %s16, 0
      %p64 = por %p62, %p63
      %s66 = sadd.s32 %s65, 1
      %p69 = scmp.eq.s32.totalorder %s10, 1
      %p70 = scmp.ne.s32.totalorder %s65, %s67
      %p71 = scmp.eq.s32.totalorder %s10, 0
      %p72 = por %p70, %p71
      %p73 = scmp.ne.s32.totalorder %s65, %s67
      %p74 = scmp.eq.s32.totalorder %s15, 1
      %p75 = por %p73, %p74
      %p76 = scmp.ne.s32.totalorder %s67, %s68
      %p77 = scmp.eq.s32.totalorder %s15, 0
      %p78 = por %p76, %p77
      %p79 = scmp.ne.s32.totalorder %s67, %s68
      %p80 = scmp.eq.s32.totalorder %s16, 1
      %p81 = por %p79, %p80
      %p83 = scmp.ne.s32.totalorder %s68, %s82
      %p84 = scmp.eq.s32.totalorder %s16, 0
      %p85 = por %p83, %p84
      %s86 = ssub.s32 %s10, %s17
      %p87 = scmp.eq.s32.totalorder %s86, 0
      %s89 = sadd.s32 %s88, 1
      %s90 = scalar_select %p87, %s88, %s89
      %p93 = pneg %p87
      %p94 = scmp.eq.s32.totalorder %s10, 1
      %p95 = por %p93, %p94
      %p96 = scmp.ne.s32.totalorder %s88, %s91
      %p97 = scmp.eq.s32.totalorder %s10, 0
      %p98 = por %p96, %p97
      %p99 = scmp.ne.s32.totalorder %s88, %s91
      %p100 = scmp.eq.s32.totalorder %s15, 1
      %p101 = por %p99, %p100
      %p102 = scmp.ne.s32.totalorder %s91, %s92
      %p103 = scmp.eq.s32.totalorder %s15, 0
      %p104 = por %p102, %p103
      %p105 = scmp.ne.s32.totalorder %s91, %s92
      %p106 = scmp.eq.s32.totalorder %s16, 1
      %p107 = por %p105, %p106
      %p109 = scmp.ne.s32.totalorder %s92, %s108
      %p110 = scmp.eq.s32.totalorder %s16, 0
      %p111 = por %p109, %p110
      %p112 = scmp.le.s32.totalorder 1, %s10
      %p113 = scmp.lt.s32.totalorder %s10, 3
      %p114 = pnand %p112, %p113
      %p115 = pneg %p114
      // Predicated region
      $region9: #{wae_forward.1} parent=5 // pred_check
        _
      $region10: #{wae_forward.1} parent=5 // pred_check_branch
        %117 = sbr.rel (%p114) target = $region12
      $region11: #{wae_forward.1} parent=5 // pred_region
        %s118 = ssub.s32 %s10, 1
        // Predicated region
        $region13: #{wae_forward.1} parent=11 // pred_check
          %p119 = pneg %p57
        $region14: #{wae_forward.1} parent=11 // pred_check_branch
          %121 = sbr.rel (%p119) target = $region16
        $region15: #{wae_forward.1} parent=11 // pred_region
          %s123 = ssub.s32 8192, 8192
          %124 = vsyncadd [#allocation3], %s123
          %s125 = sshll.u32 [#allocation2], 4
          %s126 = int_to_ptr.vmem [resolvable:$true] %s125
          %131 = dma.hbm_to_vmem [thread:$0]  %s1, 8192, %s126, [#allocation3], 64, 64, 4
        $region16: #{wae_forward.1} parent=11 // pred_fallthru
          _
        // Predicated region
        $region17: #{wae_forward.1} parent=11 // pred_check
          %p132 = pneg %p78
        $region18: #{wae_forward.1} parent=11 // pred_check_branch
          %134 = sbr.rel (%p132) target = $region20
        $region19: #{wae_forward.1} parent=11 // pred_region
          _
        $region20: #{wae_forward.1} parent=11 // pred_fallthru
          _
      $region12: #{wae_forward.1} parent=5 // pred_fallthru
        _
      %p135 = scmp.lt.s32.totalorder %s10, 2
      // Predicated region
      $region21: #{wae_forward.1} parent=5 // pred_check
        %p136 = pneg %p135
      $region22: #{wae_forward.1} parent=5 // pred_check_branch
        %138 = sbr.rel (%p136) target = $region24
      $region23: #{wae_forward.1} parent=5 // pred_region
        // Predicated region
        $region25: #{wae_forward.1} parent=23 // pred_check
          %p139 = pneg %p30
        $region26: #{wae_forward.1} parent=23 // pred_check_branch
          %141 = sbr.rel (%p139) target = $region28
        $region27: #{wae_forward.1} parent=23 // pred_region
          %s142 = smul.u32 6, %s10
          %p143 = scmp.lt.s32.totalorder %s142, 11
          %s144 = scalar_select %p143, %s142, 11
          %s145 = smul.addr %s144, 8
          %s146 = scalar_lea.vmem %s0, %s145
          %s147 = smul.u32 6, %s10
        $region28: #{wae_forward.1} parent=23 // pred_fallthru
          _
      $region24: #{wae_forward.1} parent=5 // pred_fallthru
        _
      %p148 = scmp.le.s32.totalorder 1, %s10
      %p149 = scmp.lt.s32.totalorder %s10, 3
      %p150 = pnand %p148, %p149
      %p151 = pneg %p150
      // Predicated region
      $region29: #{wae_forward.1} parent=5 // pred_check
        _
      $region30: #{wae_forward.1} parent=5 // pred_check_branch
        %153 = sbr.rel (%p150) target = $region32
      $region31: #{wae_forward.1} parent=5 // pred_region
        %s154 = ssub.s32 %s10, 1
        // Predicated region
        $region33: #{wae_forward.1} parent=31 // pred_check
          %p155 = pneg %p57
        $region34: #{wae_forward.1} parent=31 // pred_check_branch
          %157 = sbr.rel (%p155) target = $region36
        $region35: #{wae_forward.1} parent=31 // pred_region
          %158 = dma.done [#allocation3], 8192
        $region36: #{wae_forward.1} parent=31 // pred_fallthru
          _
        %s159 = smul.u32 6, %s15
        %p160 = scmp.lt.s32.totalorder %s159, 11
        %s161 = scalar_select %p160, %s159, 11
        %s162 = smul.addr %s161, 8
        %s163 = scalar_lea.vmem %s0, %s162
        %p164 = pneg %p36
        %p165 = pneg %p33
        %p166 = pneg %p57
        %p167 = pneg %p54
        %p168 = pneg %p78
        %p169 = pneg %p75
        %p170 = pneg %p104
        %p171 = pneg %p101
        %s172 = smul.u32 6, %s15
        %p173 = scmp.lt.s32.totalorder %s172, 11
        %s174 = scalar_select %p173, %s172, 11
        %s175 = smul.addr %s174, 8
        %s176 = scalar_lea.vmem %s3, %s175
        %s177 = smul.u32 6, %s15
        %p178 = scmp.lt.s32.totalorder %s177, 11
        %s179 = scalar_select %p178, %s177, 11
        %s180 = smul.addr %s179, 8
        %s181 = scalar_lea.vmem %s0, %s180
        %s182 = smul.u32 6, %s15
        %s183 = smul.u32 6, %s15
        %p184 = scmp.lt.s32.totalorder %s183, 11
        %s185 = scalar_select %p184, %s183, 11
        %s186 = smul.addr %s185, 8
        %s187 = scalar_lea.vmem %s3, %s186
        %s188 = smul.u32 6, %s15
        %v190 = vld [vmem:[%s181] sm:$0xff]
        %v191 = vld [vmem:[%s181 + $0x8] sm:$0xff]
        %v192 = vld [vmem:[%s181 + $0x10] sm:$0xff]
        %v193 = vld [vmem:[%s181 + $0x18] sm:$0xff]
        %v194 = vld [vmem:[%s181 + $0x20] sm:$0xff]
        %v195 = vld [vmem:[%s181 + $0x28] sm:$0xff]
        %v196 = vld [vmem:[%s2] sm:$0x1]
        %v197 = vld [vmem:[#allocation2] sm:$0xf]
        %v198 = vld [vmem:[#allocation2 + $0x4] sm:$0xf]
        %v199 = vld [vmem:[#allocation2 + $0x8] sm:$0xf]
        %v200 = vld [vmem:[#allocation2 + $0xc] sm:$0xf]
        %v201 = vpack.c.bf16 %v191, %v190
        %v202 = vpack.c.bf16 %v193, %v192
        %v203 = vpack.c.bf16 %v195, %v194
        %v204 = vlaneseq
        %v205 = vshrl.u32 %v204, 7
        %v206 = vsub.s32 0, %v205
        %v207 = vrot.slane %v196, %v206
        %v212 = vunpack.c.l.b16 %v197
        %v213 = vunpack.c.l.b16 %v198
        %v214 = vunpack.c.l.b16 %v199
        %v215 = vunpack.c.l.b16 %v200
        %v216 = vpack.c.b16 %v213, %v212
        %v217 = vpack.c.b16 %v215, %v214
        %vm220 = vcmask 261120
        %v222 = vsel %vm220, %v201, 0
        %v225 = vsel %vm220, %v202, 0
        %v228 = vsel %vm220, %v203, 0
        %230 = vmatprep.subr.bf16.mxu0 0
        %231 = vmatpush1.bf16.msra.mxu0 %v216
        %232 = vmatprep.subr.bf16.mxu0 0
        %233 = vmatpush1.bf16.msra.mxu0 %v217
        %234 = vmatprep.subr.bf16.mxu0 0
        %235 = vmatpush1.bf16.msra.mxu0 0
        %236 = vmatprep.subr.bf16.mxu0 0
        %237 = vmatpush1.bf16.msra.mxu0 0
        %238 = vmatprep.subr.bf16.mxu0 0
        %239 = vmatpush1.bf16.msra.mxu0 0
        %240 = vmatprep.subr.bf16.mxu0 0
        %241 = vmatpush1.bf16.msra.mxu0 0
        %242 = vmatprep.subr.bf16.mxu0 0
        %243 = vmatpush1.bf16.msra.mxu0 0
        %244 = vmatprep.subr.bf16.mxu0 0
        %245 = vmatpush1.bf16.msra.mxu0 0
        %246 = vmatprep.subr.bf16.mxu0 0
        %247 = vmatpush1.bf16.msra.mxu0 0
        %248 = vmatprep.subr.bf16.mxu0 0
        %249 = vmatpush1.bf16.msra.mxu0 0
        %250 = vmatprep.subr.bf16.mxu0 0
        %251 = vmatpush1.bf16.msra.mxu0 0
        %252 = vmatprep.subr.bf16.mxu0 0
        %253 = vmatpush1.bf16.msra.mxu0 0
        %254 = vmatprep.subr.bf16.mxu0 0
        %255 = vmatpush1.bf16.msra.mxu0 0
        %256 = vmatprep.subr.bf16.mxu0 0
        %257 = vmatpush1.bf16.msra.mxu0 0
        %258 = vmatprep.subr.bf16.mxu0 0
        %259 = vmatpush1.bf16.msra.mxu0 0
        %260 = vmatprep.subr.bf16.mxu0 0
        %261 = vmatpush1.bf16.msra.mxu0 0
        %262 = vmatprep.mubr.bf16.mxu0 0
        %263 = vmatmul.mubr.bf16.gmra.mrb[0].mxu0 %v222
        %v264 = vpop.f32.mrb[0].mxu0
        %v265 = vadd.f32 %v207, %v264
        %v266 = vpop.f32.mrb[0].mxu0
        %v267 = vpop.f32.mrb[0].mxu0
        %v268 = vadd.f32 %v207, %v267
        %v269 = vpop.f32.mrb[0].mxu0
        %270 = vmatprep.mubr.bf16.mxu0 0
        %271 = vmatmul.mubr.bf16.gmra.mrb[0].mxu0 %v225
        %v272 = vpop.f32.mrb[0].mxu0
        %v273 = vadd.f32 %v207, %v272
        %v274 = vpop.f32.mrb[0].mxu0
        %v275 = vpop.f32.mrb[0].mxu0
        %v276 = vadd.f32 %v207, %v275
        %v277 = vpop.f32.mrb[0].mxu0
        %278 = vmatprep.mubr.bf16.mxu0 0
        %279 = vmatmul.mubr.bf16.gmra.mrb[0].mxu0 %v228
        %v280 = vpop.f32.mrb[0].mxu0
        %v281 = vadd.f32 %v207, %v280
        %v282 = vpop.f32.mrb[0].mxu0
        %v283 = vpop.f32.mrb[0].mxu0
        %v284 = vadd.f32 %v207, %v283
        %v285 = vpop.f32.mrb[0].mxu0
        %286 = vdwg.mxu0
        %v287 = vld [vmem:[%s2 + $0x1] sm:$0x1]
        %v288 = vld [vmem:[%s2 + $0x2] sm:$0x1]
        %289 = vadd.xlane.f32.xlu0 %v265
        %v290 = vpop.xlane.xlu0 %289
        %291 = vadd.xlane.f32.xlu0 %v268
        %v292 = vpop.xlane.xlu0 %291
        %293 = vadd.xlane.f32.xlu0 %v273
        %v294 = vpop.xlane.xlu0 %293
        %295 = vadd.xlane.f32.xlu0 %v276
        %v296 = vpop.xlane.xlu0 %295
        %297 = vadd.xlane.f32.xlu0 %v281
        %v298 = vpop.xlane.xlu0 %297
        %299 = vadd.xlane.f32.xlu0 %v284
        %v300 = vpop.xlane.xlu0 %299
        %v301 = vmul.f32 %v265, %v265
        %v302 = vmul.f32 %v268, %v268
        %v303 = vmul.f32 %v273, %v273
        %v304 = vmul.f32 %v276, %v276
        %v305 = vmul.f32 %v281, %v281
        %v306 = vmul.f32 %v284, %v284
        %307 = vadd.xlane.f32.xlu0 %v301
        %v308 = vpop.xlane.xlu0 %307
        %309 = vadd.xlane.f32.xlu0 %v302
        %v310 = vpop.xlane.xlu0 %309
        %311 = vadd.xlane.f32.xlu0 %v303
        %v312 = vpop.xlane.xlu0 %311
        %313 = vadd.xlane.f32.xlu0 %v304
        %v314 = vpop.xlane.xlu0 %313
        %315 = vadd.xlane.f32.xlu0 %v305
        %v316 = vpop.xlane.xlu0 %315
        %317 = vadd.xlane.f32.xlu0 %v306
        %v318 = vpop.xlane.xlu0 %317
        %v319 = vmul.f32 %v290, 0.0125
        %v320 = vmul.f32 %v292, 0.0125
        %v321 = vmul.f32 %v294, 0.0125
        %v322 = vmul.f32 %v296, 0.0125
        %v323 = vmul.f32 %v298, 0.0125
        %v324 = vmul.f32 %v300, 0.0125
        %v325 = vmul.f32 %v308, 0.0125
        %v326 = vmul.f32 %v310, 0.0125
        %v327 = vmul.f32 %v312, 0.0125
        %v328 = vmul.f32 %v314, 0.0125
        %v329 = vmul.f32 %v316, 0.0125
        %v330 = vmul.f32 %v318, 0.0125
        %v331 = vmul.f32 %v319, %v319
        %v332 = vmul.f32 %v320, %v320
        %v333 = vmul.f32 %v321, %v321
        %v334 = vmul.f32 %v322, %v322
        %v335 = vmul.f32 %v323, %v323
        %v336 = vmul.f32 %v324, %v324
        %v337 = vsub.f32 %v325, %v331
        %v338 = vsub.f32 %v326, %v332
        %v339 = vsub.f32 %v327, %v333
        %v340 = vsub.f32 %v328, %v334
        %v341 = vsub.f32 %v329, %v335
        %v342 = vsub.f32 %v330, %v336
        %v343 = vadd.f32 %v337, 1e-05
        %v344 = vadd.f32 %v338, 1e-05
        %v345 = vadd.f32 %v339, 1e-05
        %v346 = vadd.f32 %v340, 1e-05
        %v347 = vadd.f32 %v341, 1e-05
        %v348 = vadd.f32 %v342, 1e-05
        %v349 = vrsqrt.pop %v343
        %v350 = vrsqrt.pop %v344
        %v351 = vrsqrt.pop %v345
        %v352 = vrsqrt.pop %v346
        %v353 = vrsqrt.pop %v347
        %v354 = vrsqrt.pop %v348
        %v355 = vsub.f32 %v265, %v319
        %v356 = vsub.f32 %v268, %v320
        %v357 = vsub.f32 %v273, %v321
        %v358 = vsub.f32 %v276, %v322
        %v359 = vsub.f32 %v281, %v323
        %v360 = vsub.f32 %v284, %v324
        %v361 = vmul.f32 %v355, %v349
        %v362 = vmul.f32 %v356, %v350
        %v363 = vmul.f32 %v357, %v351
        %v364 = vmul.f32 %v358, %v352
        %v365 = vmul.f32 %v359, %v353
        %v366 = vmul.f32 %v360, %v354
        %v367 = vlaneseq
        %v368 = vshrl.u32 %v367, 7
        %v369 = vsub.s32 0, %v368
        %v370 = vrot.slane %v287, %v369
        %v371 = vmul.f32 %v361, %v370
        %v372 = vmul.f32 %v362, %v370
        %v373 = vmul.f32 %v363, %v370
        %v374 = vmul.f32 %v364, %v370
        %v375 = vmul.f32 %v365, %v370
        %v376 = vmul.f32 %v366, %v370
        %v377 = vlaneseq
        %v378 = vshrl.u32 %v377, 7
        %v379 = vsub.s32 0, %v378
        %v380 = vrot.slane %v288, %v379
        %v381 = vadd.f32 %v371, %v380
        %v382 = vadd.f32 %v372, %v380
        %v383 = vadd.f32 %v373, %v380
        %v384 = vadd.f32 %v374, %v380
        %v385 = vadd.f32 %v375, %v380
        %v386 = vadd.f32 %v376, %v380
        %v387 = vmax.f32 %v381, 0.0
        %v388 = vmax.f32 %v382, 0.0
        %v389 = vmax.f32 %v383, 0.0
        %v390 = vmax.f32 %v384, 0.0
        %v391 = vmax.f32 %v385, 0.0
        %v392 = vmax.f32 %v386, 0.0
        %v393 = vld [vmem:[%s2 + $0x3] sm:$0x1]
        %s394 = scalar_lea.vmem [#allocation2], 64
        %v395 = vld [vmem:[%s394] sm:$0xf]
        %v396 = vld [vmem:[%s394 + $0x4] sm:$0xf]
        %v397 = vld [vmem:[%s394 + $0x8] sm:$0xf]
        %v398 = vld [vmem:[%s394 + $0xc] sm:$0xf]
        %v399 = vld [vmem:[%s394 + $0x10] sm:$0xf]
        %v400 = vld [vmem:[%s394 + $0x14] sm:$0xf]
        %v401 = vld [vmem:[%s394 + $0x18] sm:$0xf]
        %v402 = vld [vmem:[%s394 + $0x1c] sm:$0xf]
        %v403 = vld [vmem:[%s394 + $0x20] sm:$0xf]
        %v404 = vld [vmem:[%s394 + $0x24] sm:$0xf]
        %v405 = vld [vmem:[%s394 + $0x28] sm:$0xf]
        %v406 = vld [vmem:[%s394 + $0x2c] sm:$0xf]
        %v407 = vld [vmem:[%s394 + $0x30] sm:$0xf]
        %v408 = vld [vmem:[%s394 + $0x34] sm:$0xf]
        %v409 = vld [vmem:[%s394 + $0x38] sm:$0xf]
        %v410 = vld [vmem:[%s394 + $0x3c] sm:$0xf]
        %v411 = vpack.c.bf16 %v388, %v387
        %v412 = vpack.c.bf16 %v390, %v389
        %v413 = vpack.c.bf16 %v392, %v391
        %v414 = vlaneseq
        %v415 = vshrl.u32 %v414, 7
        %v416 = vsub.s32 0, %v415
        %v417 = vrot.slane %v393, %v416
        %v434 = vunpack.c.l.b16 %v395
        %v435 = vunpack.c.l.b16 %v396
        %v436 = vunpack.c.l.b16 %v397
        %v437 = vunpack.c.l.b16 %v398
        %v438 = vunpack.c.l.b16 %v399
        %v439 = vunpack.c.l.b16 %v400
        %v440 = vunpack.c.l.b16 %v401
        %v441 = vunpack.c.l.b16 %v402
        %v442 = vunpack.c.l.b16 %v403
        %v443 = vunpack.c.l.b16 %v404
        %v444 = vunpack.c.l.b16 %v405
        %v445 = vunpack.c.l.b16 %v406
        %v446 = vunpack.c.l.b16 %v407
        %v447 = vunpack.c.l.b16 %v408
        %v448 = vunpack.c.l.b16 %v409
        %v449 = vunpack.c.l.b16 %v410
        %v450 = vpack.c.b16 %v435, %v434
        %v451 = vpack.c.b16 %v437, %v436
        %v452 = vpack.c.b16 %v439, %v438
        %v453 = vpack.c.b16 %v441, %v440
        %v454 = vpack.c.b16 %v443, %v442
        %v455 = vpack.c.b16 %v445, %v444
        %v456 = vpack.c.b16 %v447, %v446
        %v457 = vpack.c.b16 %v449, %v448
        %466 = vmatprep.subr.bf16.mxu0 0
        %467 = vmatpush1.bf16.msra.mxu0 %v450
        %468 = vmatprep.subr.bf16.mxu0 0
        %469 = vmatpush1.bf16.msra.mxu0 %v451
        %470 = vmatprep.subr.bf16.mxu0 0
        %471 = vmatpush1.bf16.msra.mxu0 %v452
        %472 = vmatprep.subr.bf16.mxu0 0
        %473 = vmatpush1.bf16.msra.mxu0 %v453
        %474 = vmatprep.subr.bf16.mxu0 0
        %475 = vmatpush1.bf16.msra.mxu0 %v454
        %476 = vmatprep.subr.bf16.mxu0 0
        %477 = vmatpush1.bf16.msra.mxu0 %v455
        %478 = vmatprep.subr.bf16.mxu0 0
        %479 = vmatpush1.bf16.msra.mxu0 %v456
        %480 = vmatprep.subr.bf16.mxu0 0
        %481 = vmatpush1.bf16.msra.mxu0 %v457
        %482 = vmatprep.subr.bf16.mxu0 0
        %483 = vmatpush1.bf16.msra.mxu0 0
        %484 = vmatprep.subr.bf16.mxu0 0
        %485 = vmatpush1.bf16.msra.mxu0 0
        %486 = vmatprep.subr.bf16.mxu0 0
        %487 = vmatpush1.bf16.msra.mxu0 0
        %488 = vmatprep.subr.bf16.mxu0 0
        %489 = vmatpush1.bf16.msra.mxu0 0
        %490 = vmatprep.subr.bf16.mxu0 0
        %491 = vmatpush1.bf16.msra.mxu0 0
        %492 = vmatprep.subr.bf16.mxu0 0
        %493 = vmatpush1.bf16.msra.mxu0 0
        %494 = vmatprep.subr.bf16.mxu0 0
        %495 = vmatpush1.bf16.msra.mxu0 0
        %496 = vmatprep.subr.bf16.mxu0 0
        %497 = vmatpush1.bf16.msra.mxu0 0
        %498 = vmatprep.mubr.bf16.mxu0 0
        %499 = vmatmul.mubr.bf16.gmra.mrb[0].mxu0 %v411
        %v500 = vpop.f32.mrb[0].mxu0
        %v501 = vadd.f32 %v417, %v500
        %v502 = vpop.f32.mrb[0].mxu0
        %v503 = vpop.f32.mrb[0].mxu0
        %v504 = vadd.f32 %v417, %v503
        %v505 = vpop.f32.mrb[0].mxu0
        %506 = vmatprep.mubr.bf16.mxu0 0
        %507 = vmatmul.mubr.bf16.gmra.mrb[0].mxu0 %v412
        %v508 = vpop.f32.mrb[0].mxu0
        %v509 = vadd.f32 %v417, %v508
        %v510 = vpop.f32.mrb[0].mxu0
        %v511 = vpop.f32.mrb[0].mxu0
        %v512 = vadd.f32 %v417, %v511
        %v513 = vpop.f32.mrb[0].mxu0
        %514 = vmatprep.mubr.bf16.mxu0 0
        %515 = vmatmul.mubr.bf16.gmra.mrb[0].mxu0 %v413
        %v516 = vpop.f32.mrb[0].mxu0
        %v517 = vadd.f32 %v417, %v516
        %v518 = vpop.f32.mrb[0].mxu0
        %v519 = vpop.f32.mrb[0].mxu0
        %v520 = vadd.f32 %v417, %v519
        %v521 = vpop.f32.mrb[0].mxu0
        %522 = vdwg.mxu0
        %v523 = vld [vmem:[%s2 + $0x4] sm:$0x1]
        %v524 = vld [vmem:[%s2 + $0x5] sm:$0x1]
        %525 = vadd.xlane.f32.xlu0 %v501
        %v526 = vpop.xlane.xlu0 %525
        %527 = vadd.xlane.f32.xlu0 %v504
        %v528 = vpop.xlane.xlu0 %527
        %529 = vadd.xlane.f32.xlu0 %v509
        %v530 = vpop.xlane.xlu0 %529
        %531 = vadd.xlane.f32.xlu0 %v512
        %v532 = vpop.xlane.xlu0 %531
        %533 = vadd.xlane.f32.xlu0 %v517
        %v534 = vpop.xlane.xlu0 %533
        %535 = vadd.xlane.f32.xlu0 %v520
        %v536 = vpop.xlane.xlu0 %535
        %v537 = vmul.f32 %v501, %v501
        %v538 = vmul.f32 %v504, %v504
        %v539 = vmul.f32 %v509, %v509
        %v540 = vmul.f32 %v512, %v512
        %v541 = vmul.f32 %v517, %v517
        %v542 = vmul.f32 %v520, %v520
        %543 = vadd.xlane.f32.xlu0 %v537
        %v544 = vpop.xlane.xlu0 %543
        %545 = vadd.xlane.f32.xlu0 %v538
        %v546 = vpop.xlane.xlu0 %545
        %547 = vadd.xlane.f32.xlu0 %v539
        %v548 = vpop.xlane.xlu0 %547
        %549 = vadd.xlane.f32.xlu0 %v540
        %v550 = vpop.xlane.xlu0 %549
        %551 = vadd.xlane.f32.xlu0 %v541
        %v552 = vpop.xlane.xlu0 %551
        %553 = vadd.xlane.f32.xlu0 %v542
        %v554 = vpop.xlane.xlu0 %553
        %v555 = vmul.f32 %v526, 0.015625
        %v556 = vmul.f32 %v528, 0.015625
        %v557 = vmul.f32 %v530, 0.015625
        %v558 = vmul.f32 %v532, 0.015625
        %v559 = vmul.f32 %v534, 0.015625
        %v560 = vmul.f32 %v536, 0.015625
        %v561 = vmul.f32 %v544, 0.015625
        %v562 = vmul.f32 %v546, 0.015625
        %v563 = vmul.f32 %v548, 0.015625
        %v564 = vmul.f32 %v550, 0.015625
        %v565 = vmul.f32 %v552, 0.015625
        %v566 = vmul.f32 %v554, 0.015625
        %v567 = vmul.f32 %v555, %v555
        %v568 = vmul.f32 %v556, %v556
        %v569 = vmul.f32 %v557, %v557
        %v570 = vmul.f32 %v558, %v558
        %v571 = vmul.f32 %v559, %v559
        %v572 = vmul.f32 %v560, %v560
        %v573 = vsub.f32 %v561, %v567
        %v574 = vsub.f32 %v562, %v568
        %v575 = vsub.f32 %v563, %v569
        %v576 = vsub.f32 %v564, %v570
        %v577 = vsub.f32 %v565, %v571
        %v578 = vsub.f32 %v566, %v572
        %v579 = vadd.f32 %v573, 1e-05
        %v580 = vadd.f32 %v574, 1e-05
        %v581 = vadd.f32 %v575, 1e-05
        %v582 = vadd.f32 %v576, 1e-05
        %v583 = vadd.f32 %v577, 1e-05
        %v584 = vadd.f32 %v578, 1e-05
        %v585 = vrsqrt.pop %v579
        %v586 = vrsqrt.pop %v580
        %v587 = vrsqrt.pop %v581
        %v588 = vrsqrt.pop %v582
        %v589 = vrsqrt.pop %v583
        %v590 = vrsqrt.pop %v584
        %v591 = vsub.f32 %v501, %v555
        %v592 = vsub.f32 %v504, %v556
        %v593 = vsub.f32 %v509, %v557
        %v594 = vsub.f32 %v512, %v558
        %v595 = vsub.f32 %v517, %v559
        %v596 = vsub.f32 %v520, %v560
        %v597 = vmul.f32 %v591, %v585
        %v598 = vmul.f32 %v592, %v586
        %v599 = vmul.f32 %v593, %v587
        %v600 = vmul.f32 %v594, %v588
        %v601 = vmul.f32 %v595, %v589
        %v602 = vmul.f32 %v596, %v590
        %v603 = vlaneseq
        %v604 = vshrl.u32 %v603, 7
        %v605 = vsub.s32 0, %v604
        %v606 = vrot.slane %v523, %v605
        %v607 = vmul.f32 %v597, %v606
        %v608 = vmul.f32 %v598, %v606
        %v609 = vmul.f32 %v599, %v606
        %v610 = vmul.f32 %v600, %v606
        %v611 = vmul.f32 %v601, %v606
        %v612 = vmul.f32 %v602, %v606
        %v613 = vlaneseq
        %v614 = vshrl.u32 %v613, 7
        %v615 = vsub.s32 0, %v614
        %v616 = vrot.slane %v524, %v615
        %v617 = vadd.f32 %v607, %v616
        %v618 = vadd.f32 %v608, %v616
        %v619 = vadd.f32 %v609, %v616
        %v620 = vadd.f32 %v610, %v616
        %v621 = vadd.f32 %v611, %v616
        %v622 = vadd.f32 %v612, %v616
        %v623 = vmax.f32 %v617, 0.0
        %v624 = vmax.f32 %v618, 0.0
        %v625 = vmax.f32 %v619, 0.0
        %v626 = vmax.f32 %v620, 0.0
        %v627 = vmax.f32 %v621, 0.0
        %v628 = vmax.f32 %v622, 0.0
        %v629 = vld [vmem:[%s2 + $0x6] sm:$0x1]
        %s630 = scalar_lea.vmem [#allocation2], 128
        %v631 = vld [vmem:[%s630] sm:$0xf]
        %v632 = vld [vmem:[%s630 + $0x4] sm:$0xf]
        %v633 = vld [vmem:[%s630 + $0x8] sm:$0xf]
        %v634 = vld [vmem:[%s630 + $0xc] sm:$0xf]
        %v635 = vld [vmem:[%s630 + $0x10] sm:$0xf]
        %v636 = vld [vmem:[%s630 + $0x14] sm:$0xf]
        %v637 = vld [vmem:[%s630 + $0x18] sm:$0xf]
        %v638 = vld [vmem:[%s630 + $0x1c] sm:$0xf]
        %v639 = vld [vmem:[%s630 + $0x20] sm:$0xf]
        %v640 = vld [vmem:[%s630 + $0x24] sm:$0xf]
        %v641 = vld [vmem:[%s630 + $0x28] sm:$0xf]
        %v642 = vld [vmem:[%s630 + $0x2c] sm:$0xf]
        %v643 = vld [vmem:[%s630 + $0x30] sm:$0xf]
        %v644 = vld [vmem:[%s630 + $0x34] sm:$0xf]
        %v645 = vld [vmem:[%s630 + $0x38] sm:$0xf]
        %v646 = vld [vmem:[%s630 + $0x3c] sm:$0xf]
        %v647 = vpack.c.bf16 %v624, %v623
        %v648 = vpack.c.bf16 %v626, %v625
        %v649 = vpack.c.bf16 %v628, %v627
        %v650 = vlaneseq
        %v651 = vshrl.u32 %v650, 7
        %v652 = vsub.s32 0, %v651
        %v653 = vrot.slane %v629, %v652
        %v670 = vunpack.c.l.b16 %v631
        %v671 = vunpack.c.l.b16 %v632
        %v672 = vunpack.c.l.b16 %v633
        %v673 = vunpack.c.l.b16 %v634
        %v674 = vunpack.c.l.b16 %v635
        %v675 = vunpack.c.l.b16 %v636
        %v676 = vunpack.c.l.b16 %v637
        %v677 = vunpack.c.l.b16 %v638
        %v678 = vunpack.c.l.b16 %v639
        %v679 = vunpack.c.l.b16 %v640
        %v680 = vunpack.c.l.b16 %v641
        %v681 = vunpack.c.l.b16 %v642
        %v682 = vunpack.c.l.b16 %v643
        %v683 = vunpack.c.l.b16 %v644
        %v684 = vunpack.c.l.b16 %v645
        %v685 = vunpack.c.l.b16 %v646
        %v686 = vpack.c.b16 %v671, %v670
        %v687 = vpack.c.b16 %v673, %v672
        %v688 = vpack.c.b16 %v675, %v674
        %v689 = vpack.c.b16 %v677, %v676
        %v690 = vpack.c.b16 %v679, %v678
        %v691 = vpack.c.b16 %v681, %v680
        %v692 = vpack.c.b16 %v683, %v682
        %v693 = vpack.c.b16 %v685, %v684
        %702 = vmatprep.subr.bf16.mxu0 0
        %703 = vmatpush1.bf16.msra.mxu0 %v686
        %704 = vmatprep.subr.bf16.mxu0 0
        %705 = vmatpush1.bf16.msra.mxu0 %v687
        %706 = vmatprep.subr.bf16.mxu0 0
        %707 = vmatpush1.bf16.msra.mxu0 %v688
        %708 = vmatprep.subr.bf16.mxu0 0
        %709 = vmatpush1.bf16.msra.mxu0 %v689
        %710 = vmatprep.subr.bf16.mxu0 0
        %711 = vmatpush1.bf16.msra.mxu0 %v690
        %712 = vmatprep.subr.bf16.mxu0 0
        %713 = vmatpush1.bf16.msra.mxu0 %v691
        %714 = vmatprep.subr.bf16.mxu0 0
        %715 = vmatpush1.bf16.msra.mxu0 %v692
        %716 = vmatprep.subr.bf16.mxu0 0
        %717 = vmatpush1.bf16.msra.mxu0 %v693
        %718 = vmatprep.subr.bf16.mxu0 0
        %719 = vmatpush1.bf16.msra.mxu0 0
        %720 = vmatprep.subr.bf16.mxu0 0
        %721 = vmatpush1.bf16.msra.mxu0 0
        %722 = vmatprep.subr.bf16.mxu0 0
        %723 = vmatpush1.bf16.msra.mxu0 0
        %724 = vmatprep.subr.bf16.mxu0 0
        %725 = vmatpush1.bf16.msra.mxu0 0
        %726 = vmatprep.subr.bf16.mxu0 0
        %727 = vmatpush1.bf16.msra.mxu0 0
        %728 = vmatprep.subr.bf16.mxu0 0
        %729 = vmatpush1.bf16.msra.mxu0 0
        %730 = vmatprep.subr.bf16.mxu0 0
        %731 = vmatpush1.bf16.msra.mxu0 0
        %732 = vmatprep.subr.bf16.mxu0 0
        %733 = vmatpush1.bf16.msra.mxu0 0
        %734 = vmatprep.mubr.bf16.mxu0 0
        %735 = vmatmul.mubr.bf16.gmra.mrb[0].mxu0 %v647
        %v736 = vpop.f32.mrb[0].mxu0
        %v737 = vadd.f32 %v653, %v736
        %v738 = vpop.f32.mrb[0].mxu0
        %v739 = vpop.f32.mrb[0].mxu0
        %v740 = vadd.f32 %v653, %v739
        %v741 = vpop.f32.mrb[0].mxu0
        %742 = vmatprep.mubr.bf16.mxu0 0
        %743 = vmatmul.mubr.bf16.gmra.mrb[0].mxu0 %v648
        %v744 = vpop.f32.mrb[0].mxu0
        %v745 = vadd.f32 %v653, %v744
        %v746 = vpop.f32.mrb[0].mxu0
        %v747 = vpop.f32.mrb[0].mxu0
        %v748 = vadd.f32 %v653, %v747
        %v749 = vpop.f32.mrb[0].mxu0
        %750 = vmatprep.mubr.bf16.mxu0 0
        %751 = vmatmul.mubr.bf16.gmra.mrb[0].mxu0 %v649
        %v752 = vpop.f32.mrb[0].mxu0
        %v753 = vadd.f32 %v653, %v752
        %v754 = vpop.f32.mrb[0].mxu0
        %v755 = vpop.f32.mrb[0].mxu0
        %v756 = vadd.f32 %v653, %v755
        %v757 = vpop.f32.mrb[0].mxu0
        %758 = vdwg.mxu0
        %v759 = vld [vmem:[%s2 + $0x7] sm:$0x1]
        %v760 = vld [vmem:[%s2 + $0x8] sm:$0x1]
        %761 = vadd.xlane.f32.xlu0 %v737
        %v762 = vpop.xlane.xlu0 %761
        %763 = vadd.xlane.f32.xlu0 %v740
        %v764 = vpop.xlane.xlu0 %763
        %765 = vadd.xlane.f32.xlu0 %v745
        %v766 = vpop.xlane.xlu0 %765
        %767 = vadd.xlane.f32.xlu0 %v748
        %v768 = vpop.xlane.xlu0 %767
        %769 = vadd.xlane.f32.xlu0 %v753
        %v770 = vpop.xlane.xlu0 %769
        %771 = vadd.xlane.f32.xlu0 %v756
        %v772 = vpop.xlane.xlu0 %771
        %v773 = vmul.f32 %v737, %v737
        %v774 = vmul.f32 %v740, %v740
        %v775 = vmul.f32 %v745, %v745
        %v776 = vmul.f32 %v748, %v748
        %v777 = vmul.f32 %v753, %v753
        %v778 = vmul.f32 %v756, %v756
        %779 = vadd.xlane.f32.xlu0 %v773
        %v780 = vpop.xlane.xlu0 %779
        %781 = vadd.xlane.f32.xlu0 %v774
        %v782 = vpop.xlane.xlu0 %781
        %783 = vadd.xlane.f32.xlu0 %v775
        %v784 = vpop.xlane.xlu0 %783
        %785 = vadd.xlane.f32.xlu0 %v776
        %v786 = vpop.xlane.xlu0 %785
        %787 = vadd.xlane.f32.xlu0 %v777
        %v788 = vpop.xlane.xlu0 %787
        %789 = vadd.xlane.f32.xlu0 %v778
        %v790 = vpop.xlane.xlu0 %789
        %v791 = vmul.f32 %v762, 0.020833334
        %v792 = vmul.f32 %v764, 0.020833334
        %v793 = vmul.f32 %v766, 0.020833334
        %v794 = vmul.f32 %v768, 0.020833334
        %v795 = vmul.f32 %v770, 0.020833334
        %v796 = vmul.f32 %v772, 0.020833334
        %v797 = vmul.f32 %v780, 0.020833334
        %v798 = vmul.f32 %v782, 0.020833334
        %v799 = vmul.f32 %v784, 0.020833334
        %v800 = vmul.f32 %v786, 0.020833334
        %v801 = vmul.f32 %v788, 0.020833334
        %v802 = vmul.f32 %v790, 0.020833334
        %v803 = vmul.f32 %v791, %v791
        %v804 = vmul.f32 %v792, %v792
        %v805 = vmul.f32 %v793, %v793
        %v806 = vmul.f32 %v794, %v794
        %v807 = vmul.f32 %v795, %v795
        %v808 = vmul.f32 %v796, %v796
        %v809 = vsub.f32 %v797, %v803
        %v810 = vsub.f32 %v798, %v804
        %v811 = vsub.f32 %v799, %v805
        %v812 = vsub.f32 %v800, %v806
        %v813 = vsub.f32 %v801, %v807
        %v814 = vsub.f32 %v802, %v808
        %v815 = vadd.f32 %v809, 1e-05
        %v816 = vadd.f32 %v810, 1e-05
        %v817 = vadd.f32 %v811, 1e-05
        %v818 = vadd.f32 %v812, 1e-05
        %v819 = vadd.f32 %v813, 1e-05
        %v820 = vadd.f32 %v814, 1e-05
        %v821 = vrsqrt.pop %v815
        %v822 = vrsqrt.pop %v816
        %v823 = vrsqrt.pop %v817
        %v824 = vrsqrt.pop %v818
        %v825 = vrsqrt.pop %v819
        %v826 = vrsqrt.pop %v820
        %v827 = vsub.f32 %v737, %v791
        %v828 = vsub.f32 %v740, %v792
        %v829 = vsub.f32 %v745, %v793
        %v830 = vsub.f32 %v748, %v794
        %v831 = vsub.f32 %v753, %v795
        %v832 = vsub.f32 %v756, %v796
        %v833 = vmul.f32 %v827, %v821
        %v834 = vmul.f32 %v828, %v822
        %v835 = vmul.f32 %v829, %v823
        %v836 = vmul.f32 %v830, %v824
        %v837 = vmul.f32 %v831, %v825
        %v838 = vmul.f32 %v832, %v826
        %v839 = vlaneseq
        %v840 = vshrl.u32 %v839, 7
        %v841 = vsub.s32 0, %v840
        %v842 = vrot.slane %v759, %v841
        %v843 = vmul.f32 %v833, %v842
        %v844 = vmul.f32 %v834, %v842
        %v845 = vmul.f32 %v835, %v842
        %v846 = vmul.f32 %v836, %v842
        %v847 = vmul.f32 %v837, %v842
        %v848 = vmul.f32 %v838, %v842
        %v849 = vlaneseq
        %v850 = vshrl.u32 %v849, 7
        %v851 = vsub.s32 0, %v850
        %v852 = vrot.slane %v760, %v851
        %v853 = vadd.f32 %v843, %v852
        %v854 = vadd.f32 %v844, %v852
        %v855 = vadd.f32 %v845, %v852
        %v856 = vadd.f32 %v846, %v852
        %v857 = vadd.f32 %v847, %v852
        %v858 = vadd.f32 %v848, %v852
        %v859 = vmax.f32 %v853, 0.0
        %v860 = vmax.f32 %v854, 0.0
        %v861 = vmax.f32 %v855, 0.0
        %v862 = vmax.f32 %v856, 0.0
        %v863 = vmax.f32 %v857, 0.0
        %v864 = vmax.f32 %v858, 0.0
        %v865 = vld [vmem:[%s2 + $0x9] sm:$0x1]
        %s866 = scalar_lea.vmem [#allocation2], 192
        %v867 = vld [vmem:[%s866] sm:$0xf]
        %v868 = vld [vmem:[%s866 + $0x4] sm:$0xf]
        %v869 = vld [vmem:[%s866 + $0x8] sm:$0xf]
        %v870 = vld [vmem:[%s866 + $0xc] sm:$0xf]
        %v871 = vld [vmem:[%s866 + $0x10] sm:$0xf]
        %v872 = vld [vmem:[%s866 + $0x14] sm:$0xf]
        %v873 = vld [vmem:[%s866 + $0x18] sm:$0xf]
        %v874 = vld [vmem:[%s866 + $0x1c] sm:$0xf]
        %v875 = vld [vmem:[%s866 + $0x20] sm:$0xf]
        %v876 = vld [vmem:[%s866 + $0x24] sm:$0xf]
        %v877 = vld [vmem:[%s866 + $0x28] sm:$0xf]
        %v878 = vld [vmem:[%s866 + $0x2c] sm:$0xf]
        %v879 = vld [vmem:[%s866 + $0x30] sm:$0xf]
        %v880 = vld [vmem:[%s866 + $0x34] sm:$0xf]
        %v881 = vld [vmem:[%s866 + $0x38] sm:$0xf]
        %v882 = vld [vmem:[%s866 + $0x3c] sm:$0xf]
        %v883 = vpack.c.bf16 %v860, %v859
        %v884 = vpack.c.bf16 %v862, %v861
        %v885 = vpack.c.bf16 %v864, %v863
        %v886 = vlaneseq
        %v887 = vshrl.u32 %v886, 7
        %v888 = vsub.s32 0, %v887
        %v889 = vrot.slane %v865, %v888
        %v906 = vunpack.c.l.b16 %v867
        %v907 = vunpack.c.l.b16 %v868
        %v908 = vunpack.c.l.b16 %v869
        %v909 = vunpack.c.l.b16 %v870
        %v910 = vunpack.c.l.b16 %v871
        %v911 = vunpack.c.l.b16 %v872
        %v912 = vunpack.c.l.b16 %v873
        %v913 = vunpack.c.l.b16 %v874
        %v914 = vunpack.c.l.b16 %v875
        %v915 = vunpack.c.l.b16 %v876
        %v916 = vunpack.c.l.b16 %v877
        %v917 = vunpack.c.l.b16 %v878
        %v918 = vunpack.c.l.b16 %v879
        %v919 = vunpack.c.l.b16 %v880
        %v920 = vunpack.c.l.b16 %v881
        %v921 = vunpack.c.l.b16 %v882
        %v922 = vpack.c.b16 %v907, %v906
        %v923 = vpack.c.b16 %v909, %v908
        %v924 = vpack.c.b16 %v911, %v910
        %v925 = vpack.c.b16 %v913, %v912
        %v926 = vpack.c.b16 %v915, %v914
        %v927 = vpack.c.b16 %v917, %v916
        %v928 = vpack.c.b16 %v919, %v918
        %v929 = vpack.c.b16 %v921, %v920
        %938 = vmatprep.subr.bf16.mxu0 0
        %939 = vmatpush1.bf16.msra.mxu0 %v922
        %940 = vmatprep.subr.bf16.mxu0 0
        %941 = vmatpush1.bf16.msra.mxu0 %v923
        %942 = vmatprep.subr.bf16.mxu0 0
        %943 = vmatpush1.bf16.msra.mxu0 %v924
        %944 = vmatprep.subr.bf16.mxu0 0
        %945 = vmatpush1.bf16.msra.mxu0 %v925
        %946 = vmatprep.subr.bf16.mxu0 0
        %947 = vmatpush1.bf16.msra.mxu0 %v926
        %948 = vmatprep.subr.bf16.mxu0 0
        %949 = vmatpush1.bf16.msra.mxu0 %v927
        %950 = vmatprep.subr.bf16.mxu0 0
        %951 = vmatpush1.bf16.msra.mxu0 %v928
        %952 = vmatprep.subr.bf16.mxu0 0
        %953 = vmatpush1.bf16.msra.mxu0 %v929
        %954 = vmatprep.subr.bf16.mxu0 0
        %955 = vmatpush1.bf16.msra.mxu0 0
        %956 = vmatprep.subr.bf16.mxu0 0
        %957 = vmatpush1.bf16.msra.mxu0 0
        %958 = vmatprep.subr.bf16.mxu0 0
        %959 = vmatpush1.bf16.msra.mxu0 0
        %960 = vmatprep.subr.bf16.mxu0 0
        %961 = vmatpush1.bf16.msra.mxu0 0
        %962 = vmatprep.subr.bf16.mxu0 0
        %963 = vmatpush1.bf16.msra.mxu0 0
        %964 = vmatprep.subr.bf16.mxu0 0
        %965 = vmatpush1.bf16.msra.mxu0 0
        %966 = vmatprep.subr.bf16.mxu0 0
        %967 = vmatpush1.bf16.msra.mxu0 0
        %968 = vmatprep.subr.bf16.mxu0 0
        %969 = vmatpush1.bf16.msra.mxu0 0
        %970 = vmatprep.mubr.bf16.mxu0 0
        %971 = vmatmul.mubr.bf16.gmra.mrb[0].mxu0 %v883
        %v972 = vpop.f32.mrb[0].mxu0
        %v973 = vadd.f32 %v889, %v972
        %v974 = vpop.f32.mrb[0].mxu0
        %v975 = vpop.f32.mrb[0].mxu0
        %v976 = vadd.f32 %v889, %v975
        %v977 = vpop.f32.mrb[0].mxu0
        %978 = vmatprep.mubr.bf16.mxu0 0
        %979 = vmatmul.mubr.bf16.gmra.mrb[0].mxu0 %v884
        %v980 = vpop.f32.mrb[0].mxu0
        %v981 = vadd.f32 %v889, %v980
        %v982 = vpop.f32.mrb[0].mxu0
        %v983 = vpop.f32.mrb[0].mxu0
        %v984 = vadd.f32 %v889, %v983
        %v985 = vpop.f32.mrb[0].mxu0
        %986 = vmatprep.mubr.bf16.mxu0 0
        %987 = vmatmul.mubr.bf16.gmra.mrb[0].mxu0 %v885
        %v988 = vpop.f32.mrb[0].mxu0
        %v989 = vadd.f32 %v889, %v988
        %v990 = vpop.f32.mrb[0].mxu0
        %v991 = vpop.f32.mrb[0].mxu0
        %v992 = vadd.f32 %v889, %v991
        %v993 = vpop.f32.mrb[0].mxu0
        %994 = vdwg.mxu0
        %v995 = vld [vmem:[%s2 + $0xa] sm:$0x1]
        %s996 = scalar_lea.vmem [#allocation2], 256
        %v997 = vld [vmem:[%s996] sm:$0xf]
        %v998 = vld [vmem:[%s996 + $0x4] sm:$0xf]
        %v999 = vld [vmem:[%s996 + $0x8] sm:$0xf]
        %v1000 = vld [vmem:[%s996 + $0xc] sm:$0xf]
        %v1001 = vld [vmem:[%s996 + $0x10] sm:$0xf]
        %v1002 = vld [vmem:[%s996 + $0x14] sm:$0xf]
        %v1003 = vld [vmem:[%s996 + $0x18] sm:$0xf]
        %v1004 = vld [vmem:[%s996 + $0x1c] sm:$0xf]
        %v1005 = vld [vmem:[%s996 + $0x20] sm:$0xf]
        %v1006 = vld [vmem:[%s996 + $0x24] sm:$0xf]
        %v1007 = vld [vmem:[%s996 + $0x28] sm:$0xf]
        %v1008 = vld [vmem:[%s996 + $0x2c] sm:$0xf]
        %v1009 = vld [vmem:[%s996 + $0x30] sm:$0xf]
        %v1010 = vld [vmem:[%s996 + $0x34] sm:$0xf]
        %v1011 = vld [vmem:[%s996 + $0x38] sm:$0xf]
        %v1012 = vld [vmem:[%s996 + $0x3c] sm:$0xf]
        %v1013 = vpack.c.bf16 %v976, %v973
        %v1014 = vpack.c.bf16 %v984, %v981
        %v1015 = vpack.c.bf16 %v992, %v989
        %v1016 = vlaneseq
        %v1017 = vshrl.u32 %v1016, 7
        %v1018 = vsub.s32 0, %v1017
        %v1019 = vrot.slane %v995, %v1018
        %v1036 = vunpack.c.l.b16 %v997
        %v1037 = vunpack.c.l.b16 %v998
        %v1038 = vunpack.c.l.b16 %v999
        %v1039 = vunpack.c.l.b16 %v1000
        %v1040 = vunpack.c.l.b16 %v1001
        %v1041 = vunpack.c.l.b16 %v1002
        %v1042 = vunpack.c.l.b16 %v1003
        %v1043 = vunpack.c.l.b16 %v1004
        %v1044 = vunpack.c.l.b16 %v1005
        %v1045 = vunpack.c.l.b16 %v1006
        %v1046 = vunpack.c.l.b16 %v1007
        %v1047 = vunpack.c.l.b16 %v1008
        %v1048 = vunpack.c.l.b16 %v1009
        %v1049 = vunpack.c.l.b16 %v1010
        %v1050 = vunpack.c.l.b16 %v1011
        %v1051 = vunpack.c.l.b16 %v1012
        %v1052 = vpack.c.b16 %v1037, %v1036
        %v1053 = vpack.c.b16 %v1039, %v1038
        %v1054 = vpack.c.b16 %v1041, %v1040
        %v1055 = vpack.c.b16 %v1043, %v1042
        %v1056 = vpack.c.b16 %v1045, %v1044
        %v1057 = vpack.c.b16 %v1047, %v1046
        %v1058 = vpack.c.b16 %v1049, %v1048
        %v1059 = vpack.c.b16 %v1051, %v1050
        %1068 = vmatprep.subr.bf16.mxu0 0
        %1069 = vmatpush1.bf16.msra.mxu0 %v1052
        %1070 = vmatprep.subr.bf16.mxu0 0
        %1071 = vmatpush1.bf16.msra.mxu0 %v1053
        %1072 = vmatprep.subr.bf16.mxu0 0
        %1073 = vmatpush1.bf16.msra.mxu0 %v1054
        %1074 = vmatprep.subr.bf16.mxu0 0
        %1075 = vmatpush1.bf16.msra.mxu0 %v1055
        %1076 = vmatprep.subr.bf16.mxu0 0
        %1077 = vmatpush1.bf16.msra.mxu0 %v1056
        %1078 = vmatprep.subr.bf16.mxu0 0
        %1079 = vmatpush1.bf16.msra.mxu0 %v1057
        %1080 = vmatprep.subr.bf16.mxu0 0
        %1081 = vmatpush1.bf16.msra.mxu0 %v1058
        %1082 = vmatprep.subr.bf16.mxu0 0
        %1083 = vmatpush1.bf16.msra.mxu0 %v1059
        %1084 = vmatprep.subr.bf16.mxu0 0
        %1085 = vmatpush1.bf16.msra.mxu0 0
        %1086 = vmatprep.subr.bf16.mxu0 0
        %1087 = vmatpush1.bf16.msra.mxu0 0
        %1088 = vmatprep.subr.bf16.mxu0 0
        %1089 = vmatpush1.bf16.msra.mxu0 0
        %1090 = vmatprep.subr.bf16.mxu0 0
        %1091 = vmatpush1.bf16.msra.mxu0 0
        %1092 = vmatprep.subr.bf16.mxu0 0
        %1093 = vmatpush1.bf16.msra.mxu0 0
        %1094 = vmatprep.subr.bf16.mxu0 0
        %1095 = vmatpush1.bf16.msra.mxu0 0
        %1096 = vmatprep.subr.bf16.mxu0 0
        %1097 = vmatpush1.bf16.msra.mxu0 0
        %1098 = vmatprep.subr.bf16.mxu0 0
        %1099 = vmatpush1.bf16.msra.mxu0 0
        %1100 = vmatprep.mubr.bf16.mxu0 0
        %1101 = vmatmul.mubr.bf16.gmra.mrb[0].mxu0 %v1013
        %v1102 = vpop.f32.mrb[0].mxu0
        %v1103 = vadd.f32 %v1019, %v1102
        %v1104 = vpop.f32.mrb[0].mxu0
        %v1105 = vpop.f32.mrb[0].mxu0
        %v1106 = vadd.f32 %v1019, %v1105
        %v1107 = vpop.f32.mrb[0].mxu0
        %1108 = vmatprep.mubr.bf16.mxu0 0
        %1109 = vmatmul.mubr.bf16.gmra.mrb[0].mxu0 %v1014
        %v1110 = vpop.f32.mrb[0].mxu0
        %v1111 = vadd.f32 %v1019, %v1110
        %v1112 = vpop.f32.mrb[0].mxu0
        %v1113 = vpop.f32.mrb[0].mxu0
        %v1114 = vadd.f32 %v1019, %v1113
        %v1115 = vpop.f32.mrb[0].mxu0
        %1116 = vmatprep.mubr.bf16.mxu0 0
        %1117 = vmatmul.mubr.bf16.gmra.mrb[0].mxu0 %v1015
        %v1118 = vpop.f32.mrb[0].mxu0
        %v1119 = vadd.f32 %v1019, %v1118
        %v1120 = vpop.f32.mrb[0].mxu0
        %v1121 = vpop.f32.mrb[0].mxu0
        %v1122 = vadd.f32 %v1019, %v1121
        %v1123 = vpop.f32.mrb[0].mxu0
        %1124 = vdwg.mxu0
        %v1125 = vld [vmem:[%s2 + $0xb] sm:$0x1]
        %v1126 = vld [vmem:[%s2 + $0xc] sm:$0x1]
        %1127 = vadd.xlane.f32.xlu0 %v1103
        %v1128 = vpop.xlane.xlu0 %1127
        %1129 = vadd.xlane.f32.xlu0 %v1106
        %v1130 = vpop.xlane.xlu0 %1129
        %1131 = vadd.xlane.f32.xlu0 %v1111
        %v1132 = vpop.xlane.xlu0 %1131
        %1133 = vadd.xlane.f32.xlu0 %v1114
        %v1134 = vpop.xlane.xlu0 %1133
        %1135 = vadd.xlane.f32.xlu0 %v1119
        %v1136 = vpop.xlane.xlu0 %1135
        %1137 = vadd.xlane.f32.xlu0 %v1122
        %v1138 = vpop.xlane.xlu0 %1137
        %v1139 = vmul.f32 %v1103, %v1103
        %v1140 = vmul.f32 %v1106, %v1106
        %v1141 = vmul.f32 %v1111, %v1111
        %v1142 = vmul.f32 %v1114, %v1114
        %v1143 = vmul.f32 %v1119, %v1119
        %v1144 = vmul.f32 %v1122, %v1122
        %1145 = vadd.xlane.f32.xlu0 %v1139
        %v1146 = vpop.xlane.xlu0 %1145
        %1147 = vadd.xlane.f32.xlu0 %v1140
        %v1148 = vpop.xlane.xlu0 %1147
        %1149 = vadd.xlane.f32.xlu0 %v1141
        %v1150 = vpop.xlane.xlu0 %1149
        %1151 = vadd.xlane.f32.xlu0 %v1142
        %v1152 = vpop.xlane.xlu0 %1151
        %1153 = vadd.xlane.f32.xlu0 %v1143
        %v1154 = vpop.xlane.xlu0 %1153
        %1155 = vadd.xlane.f32.xlu0 %v1144
        %v1156 = vpop.xlane.xlu0 %1155
        %v1157 = vmul.f32 %v1128, 0.020833334
        %v1158 = vmul.f32 %v1130, 0.020833334
        %v1159 = vmul.f32 %v1132, 0.020833334
        %v1160 = vmul.f32 %v1134, 0.020833334
        %v1161 = vmul.f32 %v1136, 0.020833334
        %v1162 = vmul.f32 %v1138, 0.020833334
        %v1163 = vmul.f32 %v1146, 0.020833334
        %v1164 = vmul.f32 %v1148, 0.020833334
        %v1165 = vmul.f32 %v1150, 0.020833334
        %v1166 = vmul.f32 %v1152, 0.020833334
        %v1167 = vmul.f32 %v1154, 0.020833334
        %v1168 = vmul.f32 %v1156, 0.020833334
        %v1169 = vmul.f32 %v1157, %v1157
        %v1170 = vmul.f32 %v1158, %v1158
        %v1171 = vmul.f32 %v1159, %v1159
        %v1172 = vmul.f32 %v1160, %v1160
        %v1173 = vmul.f32 %v1161, %v1161
        %v1174 = vmul.f32 %v1162, %v1162
        %v1175 = vsub.f32 %v1163, %v1169
        %v1176 = vsub.f32 %v1164, %v1170
        %v1177 = vsub.f32 %v1165, %v1171
        %v1178 = vsub.f32 %v1166, %v1172
        %v1179 = vsub.f32 %v1167, %v1173
        %v1180 = vsub.f32 %v1168, %v1174
        %v1181 = vadd.f32 %v1175, 1e-05
        %v1182 = vadd.f32 %v1176, 1e-05
        %v1183 = vadd.f32 %v1177, 1e-05
        %v1184 = vadd.f32 %v1178, 1e-05
        %v1185 = vadd.f32 %v1179, 1e-05
        %v1186 = vadd.f32 %v1180, 1e-05
        %v1187 = vrsqrt.pop %v1181
        %v1188 = vrsqrt.pop %v1182
        %v1189 = vrsqrt.pop %v1183
        %v1190 = vrsqrt.pop %v1184
        %v1191 = vrsqrt.pop %v1185
        %v1192 = vrsqrt.pop %v1186
        %v1193 = vsub.f32 %v1103, %v1157
        %v1194 = vsub.f32 %v1106, %v1158
        %v1195 = vsub.f32 %v1111, %v1159
        %v1196 = vsub.f32 %v1114, %v1160
        %v1197 = vsub.f32 %v1119, %v1161
        %v1198 = vsub.f32 %v1122, %v1162
        %v1199 = vmul.f32 %v1193, %v1187
        %v1200 = vmul.f32 %v1194, %v1188
        %v1201 = vmul.f32 %v1195, %v1189
        %v1202 = vmul.f32 %v1196, %v1190
        %v1203 = vmul.f32 %v1197, %v1191
        %v1204 = vmul.f32 %v1198, %v1192
        %v1205 = vlaneseq
        %v1206 = vshrl.u32 %v1205, 7
        %v1207 = vsub.s32 0, %v1206
        %v1208 = vrot.slane %v1125, %v1207
        %v1209 = vmul.f32 %v1199, %v1208
        %v1210 = vmul.f32 %v1200, %v1208
        %v1211 = vmul.f32 %v1201, %v1208
        %v1212 = vmul.f32 %v1202, %v1208
        %v1213 = vmul.f32 %v1203, %v1208
        %v1214 = vmul.f32 %v1204, %v1208
        %v1215 = vlaneseq
        %v1216 = vshrl.u32 %v1215, 7
        %v1217 = vsub.s32 0, %v1216
        %v1218 = vrot.slane %v1126, %v1217
        %v1219 = vadd.f32 %v1209, %v1218
        %v1220 = vadd.f32 %v1210, %v1218
        %v1221 = vadd.f32 %v1211, %v1218
        %v1222 = vadd.f32 %v1212, %v1218
        %v1223 = vadd.f32 %v1213, %v1218
        %v1224 = vadd.f32 %v1214, %v1218
        %v1225 = vmax.f32 %v1219, 0.0
        %v1226 = vmax.f32 %v1220, 0.0
        %v1227 = vmax.f32 %v1221, 0.0
        %v1228 = vmax.f32 %v1222, 0.0
        %v1229 = vmax.f32 %v1223, 0.0
        %v1230 = vmax.f32 %v1224, 0.0
        %v1231 = vld [vmem:[%s2 + $0xd] sm:$0x1]
        %s1232 = scalar_lea.vmem [#allocation2], 320
        %v1233 = vld [vmem:[%s1232] sm:$0xf]
        %v1234 = vld [vmem:[%s1232 + $0x4] sm:$0xf]
        %v1235 = vld [vmem:[%s1232 + $0x8] sm:$0xf]
        %v1236 = vld [vmem:[%s1232 + $0xc] sm:$0xf]
        %v1237 = vld [vmem:[%s1232 + $0x10] sm:$0xf]
        %v1238 = vld [vmem:[%s1232 + $0x14] sm:$0xf]
        %v1239 = vld [vmem:[%s1232 + $0x18] sm:$0xf]
        %v1240 = vld [vmem:[%s1232 + $0x1c] sm:$0xf]
        %v1241 = vld [vmem:[%s1232 + $0x20] sm:$0xf]
        %v1242 = vld [vmem:[%s1232 + $0x24] sm:$0xf]
        %v1243 = vld [vmem:[%s1232 + $0x28] sm:$0xf]
        %v1244 = vld [vmem:[%s1232 + $0x2c] sm:$0xf]
        %v1245 = vld [vmem:[%s1232 + $0x30] sm:$0xf]
        %v1246 = vld [vmem:[%s1232 + $0x34] sm:$0xf]
        %v1247 = vld [vmem:[%s1232 + $0x38] sm:$0xf]
        %v1248 = vld [vmem:[%s1232 + $0x3c] sm:$0xf]
        %v1249 = vpack.c.bf16 %v1226, %v1225
        %v1250 = vpack.c.bf16 %v1228, %v1227
        %v1251 = vpack.c.bf16 %v1230, %v1229
        %v1252 = vlaneseq
        %v1253 = vshrl.u32 %v1252, 7
        %v1254 = vsub.s32 0, %v1253
        %v1255 = vrot.slane %v1231, %v1254
        %v1272 = vunpack.c.l.b16 %v1233
        %v1273 = vunpack.c.l.b16 %v1234
        %v1274 = vunpack.c.l.b16 %v1235
        %v1275 = vunpack.c.l.b16 %v1236
        %v1276 = vunpack.c.l.b16 %v1237
        %v1277 = vunpack.c.l.b16 %v1238
        %v1278 = vunpack.c.l.b16 %v1239
        %v1279 = vunpack.c.l.b16 %v1240
        %v1280 = vunpack.c.l.b16 %v1241
        %v1281 = vunpack.c.l.b16 %v1242
        %v1282 = vunpack.c.l.b16 %v1243
        %v1283 = vunpack.c.l.b16 %v1244
        %v1284 = vunpack.c.l.b16 %v1245
        %v1285 = vunpack.c.l.b16 %v1246
        %v1286 = vunpack.c.l.b16 %v1247
        %v1287 = vunpack.c.l.b16 %v1248
        %v1288 = vpack.c.b16 %v1273, %v1272
        %v1289 = vpack.c.b16 %v1275, %v1274
        %v1290 = vpack.c.b16 %v1277, %v1276
        %v1291 = vpack.c.b16 %v1279, %v1278
        %v1292 = vpack.c.b16 %v1281, %v1280
        %v1293 = vpack.c.b16 %v1283, %v1282
        %v1294 = vpack.c.b16 %v1285, %v1284
        %v1295 = vpack.c.b16 %v1287, %v1286
        %1304 = vmatprep.subr.bf16.mxu0 0
        %1305 = vmatpush1.bf16.msra.mxu0 %v1288
        %1306 = vmatprep.subr.bf16.mxu0 0
        %1307 = vmatpush1.bf16.msra.mxu0 %v1289
        %1308 = vmatprep.subr.bf16.mxu0 0
        %1309 = vmatpush1.bf16.msra.mxu0 %v1290
        %1310 = vmatprep.subr.bf16.mxu0 0
        %1311 = vmatpush1.bf16.msra.mxu0 %v1291
        %1312 = vmatprep.subr.bf16.mxu0 0
        %1313 = vmatpush1.bf16.msra.mxu0 %v1292
        %1314 = vmatprep.subr.bf16.mxu0 0
        %1315 = vmatpush1.bf16.msra.mxu0 %v1293
        %1316 = vmatprep.subr.bf16.mxu0 0
        %1317 = vmatpush1.bf16.msra.mxu0 %v1294
        %1318 = vmatprep.subr.bf16.mxu0 0
        %1319 = vmatpush1.bf16.msra.mxu0 %v1295
        %1320 = vmatprep.subr.bf16.mxu0 0
        %1321 = vmatpush1.bf16.msra.mxu0 0
        %1322 = vmatprep.subr.bf16.mxu0 0
        %1323 = vmatpush1.bf16.msra.mxu0 0
        %1324 = vmatprep.subr.bf16.mxu0 0
        %1325 = vmatpush1.bf16.msra.mxu0 0
        %1326 = vmatprep.subr.bf16.mxu0 0
        %1327 = vmatpush1.bf16.msra.mxu0 0
        %1328 = vmatprep.subr.bf16.mxu0 0
        %1329 = vmatpush1.bf16.msra.mxu0 0
        %1330 = vmatprep.subr.bf16.mxu0 0
        %1331 = vmatpush1.bf16.msra.mxu0 0
        %1332 = vmatprep.subr.bf16.mxu0 0
        %1333 = vmatpush1.bf16.msra.mxu0 0
        %1334 = vmatprep.subr.bf16.mxu0 0
        %1335 = vmatpush1.bf16.msra.mxu0 0
        %1336 = vmatprep.mubr.bf16.mxu0 0
        %1337 = vmatmul.mubr.bf16.gmra.mrb[0].mxu0 %v1249
        %v1338 = vpop.f32.mrb[0].mxu0
        %v1339 = vadd.f32 %v1255, %v1338
        %v1340 = vpop.f32.mrb[0].mxu0
        %v1341 = vpop.f32.mrb[0].mxu0
        %v1342 = vadd.f32 %v1255, %v1341
        %v1343 = vpop.f32.mrb[0].mxu0
        %1344 = vmatprep.mubr.bf16.mxu0 0
        %1345 = vmatmul.mubr.bf16.gmra.mrb[0].mxu0 %v1250
        %v1346 = vpop.f32.mrb[0].mxu0
        %v1347 = vadd.f32 %v1255, %v1346
        %v1348 = vpop.f32.mrb[0].mxu0
        %v1349 = vpop.f32.mrb[0].mxu0
        %v1350 = vadd.f32 %v1255, %v1349
        %v1351 = vpop.f32.mrb[0].mxu0
        %1352 = vmatprep.mubr.bf16.mxu0 0
        %1353 = vmatmul.mubr.bf16.gmra.mrb[0].mxu0 %v1251
        %v1354 = vpop.f32.mrb[0].mxu0
        %v1355 = vadd.f32 %v1255, %v1354
        %v1356 = vpop.f32.mrb[0].mxu0
        %v1357 = vpop.f32.mrb[0].mxu0
        %v1358 = vadd.f32 %v1255, %v1357
        %v1359 = vpop.f32.mrb[0].mxu0
        %1360 = vdwg.mxu0
        %v1361 = vld [vmem:[%s2 + $0xe] sm:$0x1]
        %v1362 = vld [vmem:[%s2 + $0xf] sm:$0x1]
        %1363 = vadd.xlane.f32.xlu0 %v1339
        %v1364 = vpop.xlane.xlu0 %1363
        %1365 = vadd.xlane.f32.xlu0 %v1342
        %v1366 = vpop.xlane.xlu0 %1365
        %1367 = vadd.xlane.f32.xlu0 %v1347
        %v1368 = vpop.xlane.xlu0 %1367
        %1369 = vadd.xlane.f32.xlu0 %v1350
        %v1370 = vpop.xlane.xlu0 %1369
        %1371 = vadd.xlane.f32.xlu0 %v1355
        %v1372 = vpop.xlane.xlu0 %1371
        %1373 = vadd.xlane.f32.xlu0 %v1358
        %v1374 = vpop.xlane.xlu0 %1373
        %v1375 = vmul.f32 %v1339, %v1339
        %v1376 = vmul.f32 %v1342, %v1342
        %v1377 = vmul.f32 %v1347, %v1347
        %v1378 = vmul.f32 %v1350, %v1350
        %v1379 = vmul.f32 %v1355, %v1355
        %v1380 = vmul.f32 %v1358, %v1358
        %1381 = vadd.xlane.f32.xlu0 %v1375
        %v1382 = vpop.xlane.xlu0 %1381
        %1383 = vadd.xlane.f32.xlu0 %v1376
        %v1384 = vpop.xlane.xlu0 %1383
        %1385 = vadd.xlane.f32.xlu0 %v1377
        %v1386 = vpop.xlane.xlu0 %1385
        %1387 = vadd.xlane.f32.xlu0 %v1378
        %v1388 = vpop.xlane.xlu0 %1387
        %1389 = vadd.xlane.f32.xlu0 %v1379
        %v1390 = vpop.xlane.xlu0 %1389
        %1391 = vadd.xlane.f32.xlu0 %v1380
        %v1392 = vpop.xlane.xlu0 %1391
        %v1393 = vmul.f32 %v1364, 0.015625
        %v1394 = vmul.f32 %v1366, 0.015625
        %v1395 = vmul.f32 %v1368, 0.015625
        %v1396 = vmul.f32 %v1370, 0.015625
        %v1397 = vmul.f32 %v1372, 0.015625
        %v1398 = vmul.f32 %v1374, 0.015625
        %v1399 = vmul.f32 %v1382, 0.015625
        %v1400 = vmul.f32 %v1384, 0.015625
        %v1401 = vmul.f32 %v1386, 0.015625
        %v1402 = vmul.f32 %v1388, 0.015625
        %v1403 = vmul.f32 %v1390, 0.015625
        %v1404 = vmul.f32 %v1392, 0.015625
        %v1405 = vmul.f32 %v1393, %v1393
        %v1406 = vmul.f32 %v1394, %v1394
        %v1407 = vmul.f32 %v1395, %v1395
        %v1408 = vmul.f32 %v1396, %v1396
        %v1409 = vmul.f32 %v1397, %v1397
        %v1410 = vmul.f32 %v1398, %v1398
        %v1411 = vsub.f32 %v1399, %v1405
        %v1412 = vsub.f32 %v1400, %v1406
        %v1413 = vsub.f32 %v1401, %v1407
        %v1414 = vsub.f32 %v1402, %v1408
        %v1415 = vsub.f32 %v1403, %v1409
        %v1416 = vsub.f32 %v1404, %v1410
        %v1417 = vadd.f32 %v1411, 1e-05
        %v1418 = vadd.f32 %v1412, 1e-05
        %v1419 = vadd.f32 %v1413, 1e-05
        %v1420 = vadd.f32 %v1414, 1e-05
        %v1421 = vadd.f32 %v1415, 1e-05
        %v1422 = vadd.f32 %v1416, 1e-05
        %v1423 = vrsqrt.pop %v1417
        %v1424 = vrsqrt.pop %v1418
        %v1425 = vrsqrt.pop %v1419
        %v1426 = vrsqrt.pop %v1420
        %v1427 = vrsqrt.pop %v1421
        %v1428 = vrsqrt.pop %v1422
        %v1429 = vsub.f32 %v1339, %v1393
        %v1430 = vsub.f32 %v1342, %v1394
        %v1431 = vsub.f32 %v1347, %v1395
        %v1432 = vsub.f32 %v1350, %v1396
        %v1433 = vsub.f32 %v1355, %v1397
        %v1434 = vsub.f32 %v1358, %v1398
        %v1435 = vmul.f32 %v1429, %v1423
        %v1436 = vmul.f32 %v1430, %v1424
        %v1437 = vmul.f32 %v1431, %v1425
        %v1438 = vmul.f32 %v1432, %v1426
        %v1439 = vmul.f32 %v1433, %v1427
        %v1440 = vmul.f32 %v1434, %v1428
        %v1441 = vlaneseq
        %v1442 = vshrl.u32 %v1441, 7
        %v1443 = vsub.s32 0, %v1442
        %v1444 = vrot.slane %v1361, %v1443
        %v1445 = vmul.f32 %v1435, %v1444
        %v1446 = vmul.f32 %v1436, %v1444
        %v1447 = vmul.f32 %v1437, %v1444
        %v1448 = vmul.f32 %v1438, %v1444
        %v1449 = vmul.f32 %v1439, %v1444
        %v1450 = vmul.f32 %v1440, %v1444
        %v1451 = vlaneseq
        %v1452 = vshrl.u32 %v1451, 7
        %v1453 = vsub.s32 0, %v1452
        %v1454 = vrot.slane %v1362, %v1453
        %v1455 = vadd.f32 %v1445, %v1454
        %v1456 = vadd.f32 %v1446, %v1454
        %v1457 = vadd.f32 %v1447, %v1454
        %v1458 = vadd.f32 %v1448, %v1454
        %v1459 = vadd.f32 %v1449, %v1454
        %v1460 = vadd.f32 %v1450, %v1454
        %v1461 = vmax.f32 %v1455, 0.0
        %v1462 = vmax.f32 %v1456, 0.0
        %v1463 = vmax.f32 %v1457, 0.0
        %v1464 = vmax.f32 %v1458, 0.0
        %v1465 = vmax.f32 %v1459, 0.0
        %v1466 = vmax.f32 %v1460, 0.0
        %v1467 = vld [vmem:[%s2 + $0x10] sm:$0x1]
        %s1468 = scalar_lea.vmem [#allocation2], 384
        %v1469 = vld [vmem:[%s1468] sm:$0xf]
        %v1470 = vld [vmem:[%s1468 + $0x4] sm:$0xf]
        %v1471 = vld [vmem:[%s1468 + $0x8] sm:$0xf]
        %v1472 = vld [vmem:[%s1468 + $0xc] sm:$0xf]
        %v1473 = vld [vmem:[%s1468 + $0x10] sm:$0xf]
        %v1474 = vld [vmem:[%s1468 + $0x14] sm:$0xf]
        %v1475 = vld [vmem:[%s1468 + $0x18] sm:$0xf]
        %v1476 = vld [vmem:[%s1468 + $0x1c] sm:$0xf]
        %v1477 = vld [vmem:[%s1468 + $0x20] sm:$0xf]
        %v1478 = vld [vmem:[%s1468 + $0x24] sm:$0xf]
        %v1479 = vld [vmem:[%s1468 + $0x28] sm:$0xf]
        %v1480 = vld [vmem:[%s1468 + $0x2c] sm:$0xf]
        %v1481 = vld [vmem:[%s1468 + $0x30] sm:$0xf]
        %v1482 = vld [vmem:[%s1468 + $0x34] sm:$0xf]
        %v1483 = vld [vmem:[%s1468 + $0x38] sm:$0xf]
        %v1484 = vld [vmem:[%s1468 + $0x3c] sm:$0xf]
        %v1485 = vpack.c.bf16 %v1462, %v1461
        %v1486 = vpack.c.bf16 %v1464, %v1463
        %v1487 = vpack.c.bf16 %v1466, %v1465
        %v1488 = vlaneseq
        %v1489 = vshrl.u32 %v1488, 7
        %v1490 = vsub.s32 0, %v1489
        %v1491 = vrot.slane %v1467, %v1490
        %v1508 = vunpack.c.l.b16 %v1469
        %v1509 = vunpack.c.l.b16 %v1470
        %v1510 = vunpack.c.l.b16 %v1471
        %v1511 = vunpack.c.l.b16 %v1472
        %v1512 = vunpack.c.l.b16 %v1473
        %v1513 = vunpack.c.l.b16 %v1474
        %v1514 = vunpack.c.l.b16 %v1475
        %v1515 = vunpack.c.l.b16 %v1476
        %v1516 = vunpack.c.l.b16 %v1477
        %v1517 = vunpack.c.l.b16 %v1478
        %v1518 = vunpack.c.l.b16 %v1479
        %v1519 = vunpack.c.l.b16 %v1480
        %v1520 = vunpack.c.l.b16 %v1481
        %v1521 = vunpack.c.l.b16 %v1482
        %v1522 = vunpack.c.l.b16 %v1483
        %v1523 = vunpack.c.l.b16 %v1484
        %v1524 = vpack.c.b16 %v1509, %v1508
        %v1525 = vpack.c.b16 %v1511, %v1510
        %v1526 = vpack.c.b16 %v1513, %v1512
        %v1527 = vpack.c.b16 %v1515, %v1514
        %v1528 = vpack.c.b16 %v1517, %v1516
        %v1529 = vpack.c.b16 %v1519, %v1518
        %v1530 = vpack.c.b16 %v1521, %v1520
        %v1531 = vpack.c.b16 %v1523, %v1522
        %1540 = vmatprep.subr.bf16.mxu0 0
        %1541 = vmatpush1.bf16.msra.mxu0 %v1524
        %1542 = vmatprep.subr.bf16.mxu0 0
        %1543 = vmatpush1.bf16.msra.mxu0 %v1525
        %1544 = vmatprep.subr.bf16.mxu0 0
        %1545 = vmatpush1.bf16.msra.mxu0 %v1526
        %1546 = vmatprep.subr.bf16.mxu0 0
        %1547 = vmatpush1.bf16.msra.mxu0 %v1527
        %1548 = vmatprep.subr.bf16.mxu0 0
        %1549 = vmatpush1.bf16.msra.mxu0 %v1528
        %1550 = vmatprep.subr.bf16.mxu0 0
        %1551 = vmatpush1.bf16.msra.mxu0 %v1529
        %1552 = vmatprep.subr.bf16.mxu0 0
        %1553 = vmatpush1.bf16.msra.mxu0 %v1530
        %1554 = vmatprep.subr.bf16.mxu0 0
        %1555 = vmatpush1.bf16.msra.mxu0 %v1531
        %1556 = vmatprep.subr.bf16.mxu0 0
        %1557 = vmatpush1.bf16.msra.mxu0 0
        %1558 = vmatprep.subr.bf16.mxu0 0
        %1559 = vmatpush1.bf16.msra.mxu0 0
        %1560 = vmatprep.subr.bf16.mxu0 0
        %1561 = vmatpush1.bf16.msra.mxu0 0
        %1562 = vmatprep.subr.bf16.mxu0 0
        %1563 = vmatpush1.bf16.msra.mxu0 0
        %1564 = vmatprep.subr.bf16.mxu0 0
        %1565 = vmatpush1.bf16.msra.mxu0 0
        %1566 = vmatprep.subr.bf16.mxu0 0
        %1567 = vmatpush1.bf16.msra.mxu0 0
        %1568 = vmatprep.subr.bf16.mxu0 0
        %1569 = vmatpush1.bf16.msra.mxu0 0
        %1570 = vmatprep.subr.bf16.mxu0 0
        %1571 = vmatpush1.bf16.msra.mxu0 0
        %1572 = vmatprep.mubr.bf16.mxu0 0
        %1573 = vmatmul.mubr.bf16.gmra.mrb[0].mxu0 %v1485
        %v1574 = vpop.f32.mrb[0].mxu0
        %v1575 = vadd.f32 %v1491, %v1574
        %v1576 = vpop.f32.mrb[0].mxu0
        %v1577 = vpop.f32.mrb[0].mxu0
        %v1578 = vadd.f32 %v1491, %v1577
        %v1579 = vpop.f32.mrb[0].mxu0
        %1580 = vmatprep.mubr.bf16.mxu0 0
        %1581 = vmatmul.mubr.bf16.gmra.mrb[0].mxu0 %v1486
        %v1582 = vpop.f32.mrb[0].mxu0
        %v1583 = vadd.f32 %v1491, %v1582
        %v1584 = vpop.f32.mrb[0].mxu0
        %v1585 = vpop.f32.mrb[0].mxu0
        %v1586 = vadd.f32 %v1491, %v1585
        %v1587 = vpop.f32.mrb[0].mxu0
        %1588 = vmatprep.mubr.bf16.mxu0 0
        %1589 = vmatmul.mubr.bf16.gmra.mrb[0].mxu0 %v1487
        %v1590 = vpop.f32.mrb[0].mxu0
        %v1591 = vadd.f32 %v1491, %v1590
        %v1592 = vpop.f32.mrb[0].mxu0
        %v1593 = vpop.f32.mrb[0].mxu0
        %v1594 = vadd.f32 %v1491, %v1593
        %v1595 = vpop.f32.mrb[0].mxu0
        %1596 = vdwg.mxu0
        %v1597 = vld [vmem:[%s2 + $0x11] sm:$0x1]
        %v1598 = vld [vmem:[%s2 + $0x12] sm:$0x1]
        %1599 = vadd.xlane.f32.xlu0 %v1575
        %v1600 = vpop.xlane.xlu0 %1599
        %1601 = vadd.xlane.f32.xlu0 %v1578
        %v1602 = vpop.xlane.xlu0 %1601
        %1603 = vadd.xlane.f32.xlu0 %v1583
        %v1604 = vpop.xlane.xlu0 %1603
        %1605 = vadd.xlane.f32.xlu0 %v1586
        %v1606 = vpop.xlane.xlu0 %1605
        %1607 = vadd.xlane.f32.xlu0 %v1591
        %v1608 = vpop.xlane.xlu0 %1607
        %1609 = vadd.xlane.f32.xlu0 %v1594
        %v1610 = vpop.xlane.xlu0 %1609
        %v1611 = vmul.f32 %v1575, %v1575
        %v1612 = vmul.f32 %v1578, %v1578
        %v1613 = vmul.f32 %v1583, %v1583
        %v1614 = vmul.f32 %v1586, %v1586
        %v1615 = vmul.f32 %v1591, %v1591
        %v1616 = vmul.f32 %v1594, %v1594
        %1617 = vadd.xlane.f32.xlu0 %v1611
        %v1618 = vpop.xlane.xlu0 %1617
        %1619 = vadd.xlane.f32.xlu0 %v1612
        %v1620 = vpop.xlane.xlu0 %1619
        %1621 = vadd.xlane.f32.xlu0 %v1613
        %v1622 = vpop.xlane.xlu0 %1621
        %1623 = vadd.xlane.f32.xlu0 %v1614
        %v1624 = vpop.xlane.xlu0 %1623
        %1625 = vadd.xlane.f32.xlu0 %v1615
        %v1626 = vpop.xlane.xlu0 %1625
        %1627 = vadd.xlane.f32.xlu0 %v1616
        %v1628 = vpop.xlane.xlu0 %1627
        %v1629 = vmul.f32 %v1600, 0.0125
        %v1630 = vmul.f32 %v1602, 0.0125
        %v1631 = vmul.f32 %v1604, 0.0125
        %v1632 = vmul.f32 %v1606, 0.0125
        %v1633 = vmul.f32 %v1608, 0.0125
        %v1634 = vmul.f32 %v1610, 0.0125
        %v1635 = vmul.f32 %v1618, 0.0125
        %v1636 = vmul.f32 %v1620, 0.0125
        %v1637 = vmul.f32 %v1622, 0.0125
        %v1638 = vmul.f32 %v1624, 0.0125
        %v1639 = vmul.f32 %v1626, 0.0125
        %v1640 = vmul.f32 %v1628, 0.0125
        %v1641 = vmul.f32 %v1629, %v1629
        %v1642 = vmul.f32 %v1630, %v1630
        %v1643 = vmul.f32 %v1631, %v1631
        %v1644 = vmul.f32 %v1632, %v1632
        %v1645 = vmul.f32 %v1633, %v1633
        %v1646 = vmul.f32 %v1634, %v1634
        %v1647 = vsub.f32 %v1635, %v1641
        %v1648 = vsub.f32 %v1636, %v1642
        %v1649 = vsub.f32 %v1637, %v1643
        %v1650 = vsub.f32 %v1638, %v1644
        %v1651 = vsub.f32 %v1639, %v1645
        %v1652 = vsub.f32 %v1640, %v1646
        %v1653 = vadd.f32 %v1647, 1e-05
        %v1654 = vadd.f32 %v1648, 1e-05
        %v1655 = vadd.f32 %v1649, 1e-05
        %v1656 = vadd.f32 %v1650, 1e-05
        %v1657 = vadd.f32 %v1651, 1e-05
        %v1658 = vadd.f32 %v1652, 1e-05
        %v1659 = vrsqrt.pop %v1653
        %v1660 = vrsqrt.pop %v1654
        %v1661 = vrsqrt.pop %v1655
        %v1662 = vrsqrt.pop %v1656
        %v1663 = vrsqrt.pop %v1657
        %v1664 = vrsqrt.pop %v1658
        %v1665 = vsub.f32 %v1575, %v1629
        %v1666 = vsub.f32 %v1578, %v1630
        %v1667 = vsub.f32 %v1583, %v1631
        %v1668 = vsub.f32 %v1586, %v1632
        %v1669 = vsub.f32 %v1591, %v1633
        %v1670 = vsub.f32 %v1594, %v1634
        %v1671 = vmul.f32 %v1665, %v1659
        %v1672 = vmul.f32 %v1666, %v1660
        %v1673 = vmul.f32 %v1667, %v1661
        %v1674 = vmul.f32 %v1668, %v1662
        %v1675 = vmul.f32 %v1669, %v1663
        %v1676 = vmul.f32 %v1670, %v1664
        %v1677 = vlaneseq
        %v1678 = vshrl.u32 %v1677, 7
        %v1679 = vsub.s32 0, %v1678
        %v1680 = vrot.slane %v1597, %v1679
        %v1681 = vmul.f32 %v1671, %v1680
        %v1682 = vmul.f32 %v1672, %v1680
        %v1683 = vmul.f32 %v1673, %v1680
        %v1684 = vmul.f32 %v1674, %v1680
        %v1685 = vmul.f32 %v1675, %v1680
        %v1686 = vmul.f32 %v1676, %v1680
        %v1687 = vlaneseq
        %v1688 = vshrl.u32 %v1687, 7
        %v1689 = vsub.s32 0, %v1688
        %v1690 = vrot.slane %v1598, %v1689
        %v1691 = vadd.f32 %v1681, %v1690
        %v1692 = vadd.f32 %v1682, %v1690
        %v1693 = vadd.f32 %v1683, %v1690
        %v1694 = vadd.f32 %v1684, %v1690
        %v1695 = vadd.f32 %v1685, %v1690
        %v1696 = vadd.f32 %v1686, %v1690
        %v1697 = vmax.f32 %v1691, 0.0
        %v1698 = vmax.f32 %v1692, 0.0
        %v1699 = vmax.f32 %v1693, 0.0
        %v1700 = vmax.f32 %v1694, 0.0
        %v1701 = vmax.f32 %v1695, 0.0
        %v1702 = vmax.f32 %v1696, 0.0
        %v1703 = vld [vmem:[%s2 + $0x13] sm:$0x1]
        %s1704 = scalar_lea.vmem [#allocation2], 448
        %v1705 = vld [vmem:[%s1704] sm:$0xf]
        %v1706 = vld [vmem:[%s1704 + $0x4] sm:$0xf]
        %v1707 = vld [vmem:[%s1704 + $0x8] sm:$0xf]
        %v1708 = vld [vmem:[%s1704 + $0xc] sm:$0xf]
        %v1709 = vld [vmem:[%s1704 + $0x10] sm:$0xf]
        %v1710 = vld [vmem:[%s1704 + $0x14] sm:$0xf]
        %v1711 = vld [vmem:[%s1704 + $0x18] sm:$0xf]
        %v1712 = vld [vmem:[%s1704 + $0x1c] sm:$0xf]
        %v1713 = vld [vmem:[%s1704 + $0x20] sm:$0xf]
        %v1714 = vld [vmem:[%s1704 + $0x24] sm:$0xf]
        %v1715 = vld [vmem:[%s1704 + $0x28] sm:$0xf]
        %v1716 = vld [vmem:[%s1704 + $0x2c] sm:$0xf]
        %v1717 = vld [vmem:[%s1704 + $0x30] sm:$0xf]
        %v1718 = vld [vmem:[%s1704 + $0x34] sm:$0xf]
        %v1719 = vld [vmem:[%s1704 + $0x38] sm:$0xf]
        %v1720 = vld [vmem:[%s1704 + $0x3c] sm:$0xf]
        %v1721 = vpack.c.bf16 %v1698, %v1697
        %v1722 = vpack.c.bf16 %v1700, %v1699
        %v1723 = vpack.c.bf16 %v1702, %v1701
        %v1724 = vlaneseq
        %v1725 = vshrl.u32 %v1724, 7
        %v1726 = vsub.s32 0, %v1725
        %v1727 = vrot.slane %v1703, %v1726
        %v1744 = vunpack.c.l.b16 %v1705
        %v1745 = vunpack.c.l.b16 %v1706
        %v1746 = vunpack.c.l.b16 %v1707
        %v1747 = vunpack.c.l.b16 %v1708
        %v1748 = vunpack.c.l.b16 %v1709
        %v1749 = vunpack.c.l.b16 %v1710
        %v1750 = vunpack.c.l.b16 %v1711
        %v1751 = vunpack.c.l.b16 %v1712
        %v1752 = vunpack.c.l.b16 %v1713
        %v1753 = vunpack.c.l.b16 %v1714
        %v1754 = vunpack.c.l.b16 %v1715
        %v1755 = vunpack.c.l.b16 %v1716
        %v1756 = vunpack.c.l.b16 %v1717
        %v1757 = vunpack.c.l.b16 %v1718
        %v1758 = vunpack.c.l.b16 %v1719
        %v1759 = vunpack.c.l.b16 %v1720
        %v1760 = vpack.c.b16 %v1745, %v1744
        %v1761 = vpack.c.b16 %v1747, %v1746
        %v1762 = vpack.c.b16 %v1749, %v1748
        %v1763 = vpack.c.b16 %v1751, %v1750
        %v1764 = vpack.c.b16 %v1753, %v1752
        %v1765 = vpack.c.b16 %v1755, %v1754
        %v1766 = vpack.c.b16 %v1757, %v1756
        %v1767 = vpack.c.b16 %v1759, %v1758
        %1776 = vmatprep.subr.bf16.mxu0 0
        %1777 = vmatpush1.bf16.msra.mxu0 %v1760
        %1778 = vmatprep.subr.bf16.mxu0 0
        %1779 = vmatpush1.bf16.msra.mxu0 %v1761
        %1780 = vmatprep.subr.bf16.mxu0 0
        %1781 = vmatpush1.bf16.msra.mxu0 %v1762
        %1782 = vmatprep.subr.bf16.mxu0 0
        %1783 = vmatpush1.bf16.msra.mxu0 %v1763
        %1784 = vmatprep.subr.bf16.mxu0 0
        %1785 = vmatpush1.bf16.msra.mxu0 %v1764
        %1786 = vmatprep.subr.bf16.mxu0 0
        %1787 = vmatpush1.bf16.msra.mxu0 %v1765
        %1788 = vmatprep.subr.bf16.mxu0 0
        %1789 = vmatpush1.bf16.msra.mxu0 %v1766
        %1790 = vmatprep.subr.bf16.mxu0 0
        %1791 = vmatpush1.bf16.msra.mxu0 %v1767
        %1792 = vmatprep.subr.bf16.mxu0 0
        %1793 = vmatpush1.bf16.msra.mxu0 0
        %1794 = vmatprep.subr.bf16.mxu0 0
        %1795 = vmatpush1.bf16.msra.mxu0 0
        %1796 = vmatprep.subr.bf16.mxu0 0
        %1797 = vmatpush1.bf16.msra.mxu0 0
        %1798 = vmatprep.subr.bf16.mxu0 0
        %1799 = vmatpush1.bf16.msra.mxu0 0
        %1800 = vmatprep.subr.bf16.mxu0 0
        %1801 = vmatpush1.bf16.msra.mxu0 0
        %1802 = vmatprep.subr.bf16.mxu0 0
        %1803 = vmatpush1.bf16.msra.mxu0 0
        %1804 = vmatprep.subr.bf16.mxu0 0
        %1805 = vmatpush1.bf16.msra.mxu0 0
        %1806 = vmatprep.subr.bf16.mxu0 0
        %1807 = vmatpush1.bf16.msra.mxu0 0
        %1808 = vmatprep.mubr.bf16.mxu0 0
        %1809 = vmatmul.mubr.bf16.gmra.mrb[0].mxu0 %v1721
        %v1810 = vpop.f32.mrb[0].mxu0
        %v1811 = vadd.f32 %v1727, %v1810
        %v1812 = vpop.f32.mrb[0].mxu0
        %v1813 = vpop.f32.mrb[0].mxu0
        %v1814 = vadd.f32 %v1727, %v1813
        %v1815 = vpop.f32.mrb[0].mxu0
        %1816 = vmatprep.mubr.bf16.mxu0 0
        %1817 = vmatmul.mubr.bf16.gmra.mrb[0].mxu0 %v1722
        %v1818 = vpop.f32.mrb[0].mxu0
        %v1819 = vadd.f32 %v1727, %v1818
        %v1820 = vpop.f32.mrb[0].mxu0
        %v1821 = vpop.f32.mrb[0].mxu0
        %v1822 = vadd.f32 %v1727, %v1821
        %v1823 = vpop.f32.mrb[0].mxu0
        %1824 = vmatprep.mubr.bf16.mxu0 0
        %1825 = vmatmul.mubr.bf16.gmra.mrb[0].mxu0 %v1723
        %v1826 = vpop.f32.mrb[0].mxu0
        %v1827 = vadd.f32 %v1727, %v1826
        %v1828 = vpop.f32.mrb[0].mxu0
        %v1829 = vpop.f32.mrb[0].mxu0
        %v1830 = vadd.f32 %v1727, %v1829
        %v1831 = vpop.f32.mrb[0].mxu0
        %1832 = vdwg.mxu0
        %1833 = vst.msk [vmem:[%s187] sm:$0xff] %vm220, %v1811
        %1834 = vst.msk [vmem:[%s187 + $0x8] sm:$0xff] %vm220, %v1814
        %1835 = vst.msk [vmem:[%s187 + $0x10] sm:$0xff] %vm220, %v1819
        %1836 = vst.msk [vmem:[%s187 + $0x18] sm:$0xff] %vm220, %v1822
        %1837 = vst.msk [vmem:[%s187 + $0x20] sm:$0xff] %vm220, %v1827
        %1838 = vst.msk [vmem:[%s187 + $0x28] sm:$0xff] %vm220, %v1830
        %1845 = vrot.lane.b32.xlu0 %v973, 32
        %v1846 = vpop.permute.xlu0 %1845
        %1847 = vrot.lane.b32.xlu0 %v976, 32
        %v1848 = vpop.permute.xlu0 %1847
        %1849 = vrot.lane.b32.xlu0 %v981, 32
        %v1850 = vpop.permute.xlu0 %1849
        %1851 = vrot.lane.b32.xlu0 %v984, 32
        %v1852 = vpop.permute.xlu0 %1851
        %1853 = vrot.lane.b32.xlu0 %v989, 32
        %v1854 = vpop.permute.xlu0 %1853
        %1855 = vrot.lane.b32.xlu0 %v992, 32
        %v1856 = vpop.permute.xlu0 %1855
        %vm1863 = vcmask 277760
        %1864 = vst.msk [vmem:[%s187] sm:$0xff] %vm1863, %v1846
        %1865 = vst.msk [vmem:[%s187 + $0x8] sm:$0xff] %vm1863, %v1848
        %1866 = vst.msk [vmem:[%s187 + $0x10] sm:$0xff] %vm1863, %v1850
        %1867 = vst.msk [vmem:[%s187 + $0x18] sm:$0xff] %vm1863, %v1852
        %1868 = vst.msk [vmem:[%s187 + $0x20] sm:$0xff] %vm1863, %v1854
        %1869 = vst.msk [vmem:[%s187 + $0x28] sm:$0xff] %vm1863, %v1856
        %s1870 = smul.u32 6, %s15
        %p1871 = scmp.lt.s32.totalorder %s1870, 11
        %s1872 = scalar_select %p1871, %s1870, 11
        %s1873 = smul.addr %s1872, 8
        %s1874 = scalar_lea.vmem %s3, %s1873
        // Predicated region
        $region37: #{wae_forward.1} parent=31 // pred_check
          %p1875 = pneg %p101
        $region38: #{wae_forward.1} parent=31 // pred_check_branch
          %1877 = sbr.rel (%p1875) target = $region40
        $region39: #{wae_forward.1} parent=31 // pred_region
          %s1878 = smul.u32 6, %s15
        $region40: #{wae_forward.1} parent=31 // pred_fallthru
          _
      $region32: #{wae_forward.1} parent=5 // pred_fallthru
        _
      %p1879 = scmp.le.s32.totalorder 2, %s10
      // Predicated region
      $region41: #{wae_forward.1} parent=5 // pred_check
        %p1880 = pneg %p1879
      $region42: #{wae_forward.1} parent=5 // pred_check_branch
        %1882 = sbr.rel (%p1880) target = $region44
      $region43: #{wae_forward.1} parent=5 // pred_region
        %s1883 = ssub.s32 %s10, 2
        // Predicated region
        $region45: #{wae_forward.1} parent=43 // pred_check
          %p1884 = pneg %p107
        $region46: #{wae_forward.1} parent=43 // pred_check_branch
          %1886 = sbr.rel (%p1884) target = $region48
        $region47: #{wae_forward.1} parent=43 // pred_region
          %s1887 = smul.u32 6, %s16
          %p1888 = scmp.lt.s32.totalorder %s1887, 11
          %s1889 = scalar_select %p1888, %s1887, 11
          %s1890 = smul.addr %s1889, 8
          %s1891 = scalar_lea.vmem %s3, %s1890
        $region48: #{wae_forward.1} parent=43 // pred_fallthru
          _
      $region44: #{wae_forward.1} parent=5 // pred_fallthru
        _
    $region6: #{wae_forward.1} parent=1 // loop_footer
      %s14 = sadd.s32 1, %s10
    $region7: #{wae_forward.1} parent=1 // loop_footer_branch
      %9 = sbr.rel target = $region3
    $region8: #{wae_forward.1} parent=1 // loop_exit
      _
    %1892 = vsyncpa [#allocation3], 1
    %s1893 = scalar_lea.sflag [#allocation3], 1
    %1894 = vsyncpa %s1893, 1

</llo_original>
